<compile_context>
chip_gen: v5e
topology: v5e:2x2
jax: 0.10.0
libtpu: 0.0.40
codegen_flags: <defaults>
</compile_context>

<pallas_src>
import functools

import jax
import jax.numpy as jnp
from jax import lax
from jax.experimental import pallas as pl
from jax.experimental.pallas import tpu as pltpu

_LANE = 128          # lane width: output time-tiles prefer multiples of this
_STORE_GROUP = 8     # sublane depth: coalesce 8 time steps per dense h store


def _round_up(x: int, m: int) -> int:
    return ((x + m - 1) // m) * m


def _vmem_capacity_bytes() -> int:
    """Per-core VMEM capacity (v5e/v6e: 128 MiB, v7x: 64 MiB)."""
    try:
        cap = int(getattr(pltpu.get_tpu_info(), "vmem_capacity_bytes", 0))
        if cap > 0:
            return cap
    except Exception:
        pass
    return 64 * 1024 * 1024      # conservative fallback (v7x per-core VMEM)


def _device_kind() -> str:
    try:
        return jax.devices()[0].device_kind.lower()
    except Exception:
        return ""


def _default_weight_dtype():
    # bf16 is MXU-native on v6e/v7x: halves the resident Wh and the gx scratch.
    # On v5e (no bf16 VPU) keep f32 so per-step casts stay off the VALU.
    kind = _device_kind()
    if "v6" in kind or "v7" in kind:
        return jnp.bfloat16
    return jnp.float32


def _default_batch_blocks(batch: int) -> int:
    # v7x has 2 TensorCores; the recurrence is independent per batch element,
    # so splitting the batch across cores halves the sequential chain per core.
    # On 1-TC chips a split would serialize and lengthen the recurrence, so only
    # enable it when a v7 part is detected and each half stays sublane-aligned.
    if batch % 16 != 0:
        return 1
    return 2 if "v7" in _device_kind() else 1


def _convlstm_kernel(x_ref, wx_ref, wh_ref, b_ref, out_ref,
                     h_state, c_state, gx_buf, h_buf):
    """One grid step == `tchunk` time steps of the ConvLSTM recurrence.

    Grid: (batch_blocks [parallel], time_chunks [arbitrary / sequential]).

    x_ref   : (tchunk*Bb, C_in)    raw inputs for this chunk, rows ordered (t, b)
    wx_ref  : (C_in, 4H) f32       input->gates weight (center conv tap)
    wh_ref  : (H, 4H)              hidden->gates weight (g-cols pre-scaled by 2)
    b_ref   : (1, 4H) f32          bias (g entries pre-scaled by 2)
    out_ref : (Bb, H, tchunk)      h_t for this chunk, lane-dense along time
    h_state : (Bb, H) f32          hidden state carried across time chunks
    c_state : (Bb, H) f32          cell state carried across time chunks
    gx_buf  : (tchunk*Bb, 4H)      per-chunk x-projection scratch
    h_buf   : (Bb, tchunk, H) f32  per-chunk hidden-state buffer
    """
    @pl.when(pl.program_id(1) == 0)       # first *time* chunk of this batch block
    def _init():
        h_state[...] = jnp.zeros_like(h_state)
        c_state[...] = jnp.zeros_like(c_state)

    bblk, hdim = h_state.shape
    tchunk = h_buf.shape[1]
    wh = wh_ref[...]                       # resident across the whole chunk

    # Chunk-granularity x-projection (+ bias): ONE (tchunk*Bb, C_in) @ (C_in, 4H)
    # matmul off the sequential critical path (replaces the HBM-materialized
    # 4H-wide precomputed gate stream of the previous version).
    gx_buf[...] = (
        jnp.dot(x_ref[...], wx_ref[...], preferred_element_type=jnp.float32)
        + b_ref[...]
    ).astype(gx_buf.dtype)

    # Hoisted (JAX does not CSE broadcast/iota inside loops).
    u_iota = lax.broadcasted_iota(jnp.int32, (1, _STORE_GROUP, 1), 1)

    def group_body(gi, carry):
        h_prev, c_prev = carry
        base = pl.multiple_of(gi * (_STORE_GROUP * bblk), _STORE_GROUP * bblk)
        # Coalesced store slab: 8 hidden states stitched on VALU slack, then ONE
        # dense (unmasked) store per 8 steps instead of 8 sublane-masked stores
        # fighting over the single vst slot.
        slab = jnp.zeros((bblk, _STORE_GROUP, hdim), jnp.float32)
        for u in range(_STORE_GROUP):      # manual 8x unroll: LLO visibility
            gx_t = gx_buf[pl.ds(base + u * bblk, bblk), :].astype(jnp.float32)
            # Only this matmul is on the sequential critical path.  (On v5e with
            # small B, staging Wh once per chunk via pltpu.matmul_push_rhs could
            # trim per-step weight-push latency -- only worth it after a bundle
            # dump confirms it is the bottleneck.)
            gates = gx_t + jnp.dot(h_prev.astype(wh.dtype), wh,
                                   preferred_element_type=jnp.float32)
            # One fused sigmoid pass over the whole (Bb, 4H) slab;
            # tanh(g) == 2*sigmoid(2g) - 1 with the 2x folded into Wx/Wh/bias.
            s = jax.nn.sigmoid(gates)
            i = s[:, 0 * hdim:1 * hdim]
            f = s[:, 1 * hdim:2 * hdim]
            o = s[:, 2 * hdim:3 * hdim]
            g = 2.0 * s[:, 3 * hdim:4 * hdim] - 1.0
            c_prev = f * c_prev + i * g
            h_prev = o * jnp.tanh(c_prev)
            slab = jnp.where(
                u_iota == u,
                jnp.broadcast_to(h_prev[:, None, :],
                                 (bblk, _STORE_GROUP, hdim)),
                slab)
        t0 = pl.multiple_of(gi * _STORE_GROUP, _STORE_GROUP)
        h_buf[:, pl.ds(t0, _STORE_GROUP), :] = slab   # sublane-aligned, unmasked
        return h_prev, c_prev

    h_fin, c_fin = lax.fori_loop(0, tchunk // _STORE_GROUP, group_body,
                                 (h_state[...], c_state[...]))
    h_state[...] = h_fin
    c_state[...] = c_fin

    # Single batched relayout (Bb, T, H) -> (Bb, H, T): lane-dense output slab
    # written once per chunk and overlapped with the outgoing DMA (replaces the
    # previous per-batch-element transpose loop).
    out_ref[...] = jnp.swapaxes(h_buf[...], 1, 2).astype(out_ref.dtype)


@functools.partial(
    jax.jit,
    static_argnames=("hidden_channels", "padding", "kernel_size", "time_chunk",
                     "weight_dtype", "batch_blocks"))
def conv_lstm_forward(x, conv_weight, conv_bias, *, hidden_channels, padding,
                      kernel_size, time_chunk=128, weight_dtype=None,
                      batch_blocks=None):
    """Matches ConvLSTM.forward.

    x           : (B, C_in, S) float32   (PyTorch NCL layout)
    conv_weight : (4H, C_in + H, kernel_size)
    conv_bias   : (4H,)
    returns     : (B, H, S) float32

    MXU/vreg occupancy wants B a multiple of 8 (ideally >= 128) and H a
    multiple of 128 (256 on v6e/v7x); other shapes are correct but padded.
    """
    B, C_in, S = x.shape
    H = hidden_channels
    # Conv1d on a length-1 spatial axis must return length 1 (the module relies
    # on it); then only the center tap multiplies real (non zero-pad) data.
    assert 2 * padding - kernel_size + 2 == 1, "requires kernel_size == 2*padding + 1"

    if weight_dtype is None:
        weight_dtype = _default_weight_dtype()
    if batch_blocks is None:
        batch_blocks = _default_batch_blocks(B)
    if B % batch_blocks != 0:
        batch_blocks = 1
    bblk = B // batch_blocks

    # --- fold the Conv1d center tap + tanh->sigmoid rewrite into the weights ---
    w_center = conv_weight[:, :, padding].astype(jnp.float32)       # (4H, C_in+H)
    gate_scale = jnp.concatenate(
        [jnp.ones((3 * H,), jnp.float32), jnp.full((H,), 2.0, jnp.float32)])
    w_center = w_center * gate_scale[:, None]
    bias = (conv_bias.astype(jnp.float32) * gate_scale).reshape(1, 4 * H)
    wx = w_center[:, :C_in].T                                        # (C_in, 4H) f32
    wh = w_center[:, C_in:].T.astype(weight_dtype)                   # (H, 4H)
    # NOTE: only the recurrent Wh / gx scratch use weight_dtype; bias and the
    # x-projection stay f32 so bf16 error on the sequential path stays small.

    # --- size the time chunk from the actual per-core VMEM budget ---
    wb = jnp.dtype(weight_dtype).itemsize

    def chunk_vmem_bytes(tc):
        per_t = bblk * (2 * C_in * 4        # streamed x block (double-buffered)
                        + 4 * H * wb        # gx_buf scratch
                        + 4 * H * 4         # staging of the chunk projection result
                        + H * 4             # h_buf scratch
                        + 2 * H * 4)        # output block (double-buffered)
        fixed = (2 * H * 4 * H * wb         # resident Wh (2 bufs; pl.Buffered(1)
                                            # on its spec would reclaim one copy)
                 + 2 * C_in * 4 * H * 4     # Wx
                 + 2 * 4 * H * 4            # bias
                 + 2 * bblk * H * 4)        # carried h/c state
        return fixed + per_t * tc

    vmem_cap = _vmem_capacity_bytes()
    budget = int(vmem_cap * 0.7)
    # Prefer tchunk % 128 == 0 so the (Bb, H, tchunk) output stores stay
    # lane-dense (unmasked vst) even when S < 128; padded tail time steps run
    # after all real steps and are sliced off below.
    tchunk = _round_up(max(1, min(time_chunk, S)), _LANE)
    while tchunk > _LANE and chunk_vmem_bytes(tchunk) > budget:
        tchunk -= _LANE
    while tchunk > _STORE_GROUP and chunk_vmem_bytes(tchunk) > budget:
        tchunk -= _STORE_GROUP

    s_pad = _round_up(S, tchunk)
    n_chunks = s_pad // tchunk
    vmem_limit = int(min(vmem_cap * 0.95,
                         max(1.25 * chunk_vmem_bytes(tchunk), 32.0 * 2 ** 20)))

    # --- stream RAW x (not a precomputed gate slab):
    #     (B, C_in, S) -> (batch_blocks, S_pad*Bb, C_in), rows ordered (t, b) ---
    x_seq = jnp.transpose(x.astype(jnp.float32), (2, 0, 1))          # (S, B, C)
    if s_pad != S:
        x_seq = jnp.pad(x_seq, ((0, s_pad - S), (0, 0), (0, 0)))
    x_seq = x_seq.reshape(s_pad, batch_blocks, bblk, C_in)
    x_seq = jnp.transpose(x_seq, (1, 0, 2, 3)).reshape(
        batch_blocks, s_pad * bblk, C_in)

    out = pl.pallas_call(
        _convlstm_kernel,
        out_shape=jax.ShapeDtypeStruct((B, H, s_pad), jnp.float32),
        grid_spec=pltpu.PrefetchScalarGridSpec(
            num_scalar_prefetch=0,
            grid=(batch_blocks, n_chunks),
            in_specs=[
                pl.BlockSpec((None, tchunk * bblk, C_in),
                             lambda b, c: (b, c, 0)),
                # Constant index maps -> fetched once and kept resident.
                pl.BlockSpec((C_in, 4 * H), lambda b, c: (0, 0)),
                pl.BlockSpec((H, 4 * H), lambda b, c: (0, 0)),
                pl.BlockSpec((1, 4 * H), lambda b, c: (0, 0)),
            ],
            out_specs=pl.BlockSpec((bblk, H, tchunk), lambda b, c: (b, 0, c)),
            scratch_shapes=[
                pltpu.VMEM((bblk, H), jnp.float32),                 # h state
                pltpu.VMEM((bblk, H), jnp.float32),                 # c state
                pltpu.VMEM((tchunk * bblk, 4 * H), weight_dtype),   # gx scratch
                pltpu.VMEM((bblk, tchunk, H), jnp.float32),         # chunk h buffer
            ],
        ),
        compiler_params=pltpu.CompilerParams(
            # Batch blocks are independent (megacore-parallel on v7x); the time
            # axis is a recurrence and must run sequentially.
            dimension_semantics=("parallel", "arbitrary"),
            vmem_limit_bytes=vmem_limit,
        ),
    )(x_seq, wx, wh, bias)

    if s_pad != S:
        out = out[:, :, :S]
    return out


def _reference_forward(x, conv_weight, conv_bias, hidden_channels, padding):
    """Pure-JAX reference using a real Conv1d (independently validates the
    center-tap reduction used by the kernel)."""
    B, C_in, S = x.shape
    H = hidden_channels

    def step(carry, x_t):                                           # x_t: (B, C_in)
        h, c = carry
        combined = jnp.concatenate([x_t, h], axis=1)[:, :, None]    # (B, C_in+H, 1)
        conv = lax.conv_general_dilated(
            combined, conv_weight, window_strides=(1,),
            padding=[(padding, padding)],
            dimension_numbers=("NCH", "OIH", "NCH"))                 # (B, 4H, 1)
        gates = conv[:, :, 0] + conv_bias[None, :]
        i = jax.nn.sigmoid(gates[:, 0 * H:1 * H])
        f = jax.nn.sigmoid(gates[:, 1 * H:2 * H])
        o = jax.nn.sigmoid(gates[:, 2 * H:3 * H])
        g = jnp.tanh(gates[:, 3 * H:4 * H])
        c_next = f * c + i * g
        h_next = o * jnp.tanh(c_next)
        return (h_next, c_next), h_next

    h0 = jnp.zeros((B, H), jnp.float32)
    c0 = jnp.zeros((B, H), jnp.float32)
    _, hs = lax.scan(step, (h0, c0), jnp.transpose(x, (2, 0, 1)))
    return jnp.transpose(hs, (1, 2, 0))                              # (B, H, S)


def _make_inputs(key, batch, c_in, seq, hidden, kernel_size):
    kx, kw, kb = jax.random.split(key, 3)
    x = jax.random.normal(kx, (batch, c_in, seq), dtype=jnp.float32)
    fan_in = (c_in + hidden) * kernel_size                 # Conv1d-style U(-s, s)
    bound = 1.0 / (fan_in ** 0.5)
    conv_weight = jax.random.uniform(
        kw, (4 * hidden, c_in + hidden, kernel_size),
        minval=-bound, maxval=bound, dtype=jnp.float32)
    conv_bias = jax.random.uniform(
        kb, (4 * hidden,), minval=-bound, maxval=bound, dtype=jnp.float32)
    return x, conv_weight, conv_bias


if __name__ == "__main__":
    key = jax.random.PRNGKey(0)
    key_a, key_b = jax.random.split(key)

    # --- small config consistent with the module's forward ---
    B, C_in, S, hidden, ksz, pad = 2, 4, 8, 32, 3, 1
    x, w, b = _make_inputs(key_a, B, C_in, S, hidden, ksz)
    out = conv_lstm_forward(x, w, b, hidden_channels=hidden, padding=pad,
                            kernel_size=ksz, weight_dtype=jnp.float32)
    out = jax.block_until_ready(out)
    ref = _reference_forward(x, w, b, hidden, pad)
    assert out.shape == (B, hidden, S), out.shape
    assert jnp.allclose(out, ref, atol=2e-4, rtol=2e-4), \
        float(jnp.max(jnp.abs(out - ref)))

    # --- multi-chunk + batch-blocked path (state carried across time chunks;
    #     two "parallel" batch blocks as on v7x's two TensorCores) ---
    B2, C2, S2, H2, ksz2, pad2 = 16, 5, 300, 128, 5, 2
    x2, w2, b2 = _make_inputs(key_b, B2, C2, S2, H2, ksz2)
    out2 = conv_lstm_forward(x2, w2, b2, hidden_channels=H2, padding=pad2,
                             kernel_size=ksz2, weight_dtype=jnp.float32,
                             batch_blocks=2)
    out2 = jax.block_until_ready(out2)
    ref2 = _reference_forward(x2, w2, b2, H2, pad2)
    assert out2.shape == (B2, H2, S2), out2.shape
    assert jnp.allclose(out2, ref2, atol=2e-3, rtol=2e-3), \
        float(jnp.max(jnp.abs(out2 - ref2)))

    # --- default (auto) dtype path: bf16 Wh / gx scratch on v6e & v7x, f32 on
    #     v5e; h/c state and gate math stay f32.  Looser tolerance for bf16. ---
    out_auto = conv_lstm_forward(x, w, b, hidden_channels=hidden, padding=pad,
                                 kernel_size=ksz)
    out_auto = jax.block_until_ready(out_auto)
    assert out_auto.shape == (B, hidden, S)
    assert jnp.allclose(out_auto, ref, atol=1e-1, rtol=1e-1), \
        float(jnp.max(jnp.abs(out_auto - ref)))

    print("KERNEL_OK")
</pallas_src>

<mosaic_0001>
module attributes {stable_mosaic.version = 11 : i64} {
  func.func @_convlstm_kernel(%arg0: i32, %arg1: i32, %arg2: memref<1x256x4xf32, #tpu.memory_space<vmem>>, %arg3: memref<4x128xf32, #tpu.memory_space<vmem>>, %arg4: memref<32x128xf32, #tpu.memory_space<vmem>>, %arg5: memref<1x128xf32, #tpu.memory_space<vmem>>, %arg6: memref<2x32x128xf32, #tpu.memory_space<vmem>>, %arg7: memref<2x32xf32, #tpu.memory_space<vmem>>, %arg8: memref<2x32xf32, #tpu.memory_space<vmem>>, %arg9: memref<256x128xf32, #tpu.memory_space<vmem>>, %arg10: memref<2x128x32xf32, #tpu.memory_space<vmem>>) attributes {dimension_semantics = [#tpu.dimension_semantics<parallel>, #tpu.dimension_semantics<arbitrary>], iteration_bounds = array<i64: 1, 1>, scalar_prefetch = 0 : i64, scratch_operands = 4 : i64, tpu.core_type = #tpu.core_type<tc>, window_params = [{transform_indices = @transform_0, window_bounds = array<i64: 1, 256, 4>}, {pipeline_mode = #tpu.pipeline_mode<synchronous>, transform_indices = @transform_1, window_bounds = array<i64: 4, 128>}, {pipeline_mode = #tpu.pipeline_mode<synchronous>, transform_indices = @transform_2, window_bounds = array<i64: 32, 128>}, {pipeline_mode = #tpu.pipeline_mode<synchronous>, transform_indices = @transform_3, window_bounds = array<i64: 1, 128>}, {transform_indices = @transform_4, window_bounds = array<i64: 2, 32, 128>}]} {
    %c0_i32 = arith.constant 0 : i32
    %0 = arith.cmpi eq, %arg1, %c0_i32 : i32
    %1 = arith.extui %0 : i1 to i32
    %c0_i32_0 = arith.constant 0 : i32
    %2 = arith.cmpi ne, %1, %c0_i32_0 : i32
    scf.if %2 {
      %cst_27 = arith.constant 0.000000e+00 : f32
      %22 = vector.broadcast %cst_27 : f32 to vector<2x32xf32>
      %c0_28 = arith.constant 0 : index
      %c0_29 = arith.constant 0 : index
      %23 = vector.load %arg7[%c0_28, %c0_29] : memref<2x32xf32, #tpu.memory_space<vmem>>, vector<2x32xf32>
      tpu.vector_store %arg7[%c0_28, %c0_29], %22 {strides = array<i32>} : memref<2x32xf32, #tpu.memory_space<vmem>>, vector<2x32xf32>,
      %cst_30 = arith.constant 0.000000e+00 : f32
      %24 = vector.broadcast %cst_30 : f32 to vector<2x32xf32>
      %c0_31 = arith.constant 0 : index
      %c0_32 = arith.constant 0 : index
      %25 = vector.load %arg8[%c0_31, %c0_32] : memref<2x32xf32, #tpu.memory_space<vmem>>, vector<2x32xf32>
      tpu.vector_store %arg8[%c0_31, %c0_32], %24 {strides = array<i32>} : memref<2x32xf32, #tpu.memory_space<vmem>>, vector<2x32xf32>,
    } else {
    }
    %c0 = arith.constant 0 : index
    %c0_1 = arith.constant 0 : index
    %3 = vector.load %arg4[%c0, %c0_1] : memref<32x128xf32, #tpu.memory_space<vmem>>, vector<32x128xf32>
    %c0_2 = arith.constant 0 : index
    %c0_3 = arith.constant 0 : index
    %c0_4 = arith.constant 0 : index
    %4 = vector.load %arg2[%c0_2, %c0_3, %c0_4] : memref<1x256x4xf32, #tpu.memory_space<vmem>>, vector<1x256x4xf32>
    %5 = vector.shape_cast %4 : vector<1x256x4xf32> to vector<256x4xf32>
    %c0_5 = arith.constant 0 : index
    %c0_6 = arith.constant 0 : index
    %6 = vector.load %arg3[%c0_5, %c0_6] : memref<4x128xf32, #tpu.memory_space<vmem>>, vector<4x128xf32>
    %cst = arith.constant dense<0.000000e+00> : vector<256x128xf32>
    %7 = tpu.matmul %5, %6, %cst {dimension_numbers = #tpu.dot_dimension_numbers<[1], [0], [0], [1], [0, 0, 1, 1], [], []>} : vector<256x4xf32>, vector<4x128xf32>, vector<256x128xf32> -> vector<256x128xf32>
    %c0_7 = arith.constant 0 : index
    %c0_8 = arith.constant 0 : index
    %8 = vector.load %arg5[%c0_7, %c0_8] : memref<1x128xf32, #tpu.memory_space<vmem>>, vector<1x128xf32>
    %9 = vector.broadcast %8 : vector<1x128xf32> to vector<256x128xf32>
    %10 = arith.addf %7, %9 : vector<256x128xf32>
    %c0_9 = arith.constant 0 : index
    %c0_10 = arith.constant 0 : index
    %11 = vector.load %arg9[%c0_9, %c0_10] : memref<256x128xf32, #tpu.memory_space<vmem>>, vector<256x128xf32>
    tpu.vector_store %arg9[%c0_9, %c0_10], %10 {strides = array<i32>} : memref<256x128xf32, #tpu.memory_space<vmem>>, vector<256x128xf32>,
    %12 = tpu.iota {dimensions = array<i32: 1>} : vector<1x8x1xi32>
    %c0_11 = arith.constant 0 : index
    %c0_12 = arith.constant 0 : index
    %13 = vector.load %arg7[%c0_11, %c0_12] : memref<2x32xf32, #tpu.memory_space<vmem>>, vector<2x32xf32>
    %c0_13 = arith.constant 0 : index
    %c0_14 = arith.constant 0 : index
    %14 = vector.load %arg8[%c0_13, %c0_14] : memref<2x32xf32, #tpu.memory_space<vmem>>, vector<2x32xf32>
    %c0_i32_15 = arith.constant 0 : i32
    %c16_i32 = arith.constant 16 : i32
    %15 = arith.addi %c0_i32_15, %c16_i32 : i32
    %c1_i32 = arith.constant 1 : i32
    %16:2 = scf.for %arg11 = %c0_i32_15 to %15 step %c1_i32 iter_args(%arg12 = %13, %arg13 = %14) -> (vector<2x32xf32>, vector<2x32xf32>)  : i32 {
      %c16_i32_27 = arith.constant 16 : i32
      %22 = arith.muli %arg11, %c16_i32_27 : i32
      %23 = tpu.assume_multiple %22, 16 : i32
      %cst_28 = arith.constant 0.000000e+00 : f32
      %24 = vector.broadcast %cst_28 : f32 to vector<2x8x32xf32>
      %c0_i32_29 = arith.constant 0 : i32
      %25 = arith.addi %23, %c0_i32_29 : i32
      %26 = arith.index_cast %25 : i32 to index
      %c0_30 = arith.constant 0 : index
      %27 = vector.load %arg9[%26, %c0_30] : memref<256x128xf32, #tpu.memory_space<vmem>>, vector<2x128xf32>
      %cst_31 = arith.constant dense<0.000000e+00> : vector<2x128xf32>
      %28 = tpu.matmul %arg12, %3, %cst_31 {dimension_numbers = #tpu.dot_dimension_numbers<[1], [0], [0], [1], [0, 0, 1, 1], [], []>} : vector<2x32xf32>, vector<32x128xf32>, vector<2x128xf32> -> vector<2x128xf32>
      %29 = arith.addf %27, %28 : vector<2x128xf32>
      %30 = arith.negf %29 : vector<2x128xf32>
      %31 = math.exp %30 : vector<2x128xf32>
      %cst_32 = arith.constant 1.000000e+00 : f32
      %32 = vector.broadcast %cst_32 : f32 to vector<2x128xf32>
      %33 = arith.addf %32, %31 : vector<2x128xf32>
      %34 = arith.divf %32, %33 : vector<2x128xf32>
      %35 = vector.extract_strided_slice %34 {offsets = [0, 0], sizes = [2, 32], strides = [1, 1]} : vector<2x128xf32> to vector<2x32xf32>
      %36 = vector.extract_strided_slice %34 {offsets = [0, 32], sizes = [2, 32], strides = [1, 1]} : vector<2x128xf32> to vector<2x32xf32>
      %37 = vector.extract_strided_slice %34 {offsets = [0, 64], sizes = [2, 32], strides = [1, 1]} : vector<2x128xf32> to vector<2x32xf32>
      %38 = vector.extract_strided_slice %34 {offsets = [0, 96], sizes = [2, 32], strides = [1, 1]} : vector<2x128xf32> to vector<2x32xf32>
      %cst_33 = arith.constant 2.000000e+00 : f32
      %39 = vector.broadcast %cst_33 : f32 to vector<2x32xf32>
      %40 = arith.mulf %39, %38 : vector<2x32xf32>
      %cst_34 = arith.constant 1.000000e+00 : f32
      %41 = vector.broadcast %cst_34 : f32 to vector<2x32xf32>
      %42 = arith.subf %40, %41 : vector<2x32xf32>
      %43 = arith.mulf %36, %arg13 : vector<2x32xf32>
      %44 = arith.mulf %35, %42 : vector<2x32xf32>
      %45 = arith.addf %43, %44 : vector<2x32xf32>
      %46 = math.tanh %45 : vector<2x32xf32>
      %47 = arith.mulf %37, %46 : vector<2x32xf32>
      %c0_i32_35 = arith.constant 0 : i32
      %48 = vector.broadcast %c0_i32_35 : i32 to vector<1x8x1xi32>
      %49 = arith.cmpi eq, %12, %48 : vector<1x8x1xi32>
      %50 = vector.shape_cast %47 : vector<2x32xf32> to vector<2x1x32xf32>
      %51 = vector.shape_cast %50 : vector<2x1x32xf32> to vector<2x1x32xf32>
      %52 = vector.broadcast %51 : vector<2x1x32xf32> to vector<2x8x32xf32>
      %53 = vector.shape_cast %49 : vector<1x8x1xi1> to vector<1x8x1xi1>
      %54 = vector.broadcast %53 : vector<1x8x1xi1> to vector<2x8x32xi1>
      %55 = arith.select %54, %52, %24 : vector<2x8x32xi1>, vector<2x8x32xf32>
      %c2_i32 = arith.constant 2 : i32
      %56 = arith.addi %23, %c2_i32 : i32
      %57 = arith.index_cast %56 : i32 to index
      %c0_36 = arith.constant 0 : index
      %58 = vector.load %arg9[%57, %c0_36] : memref<256x128xf32, #tpu.memory_space<vmem>>, vector<2x128xf32>
      %cst_37 = arith.constant dense<0.000000e+00> : vector<2x128xf32>
      %59 = tpu.matmul %47, %3, %cst_37 {dimension_numbers = #tpu.dot_dimension_numbers<[1], [0], [0], [1], [0, 0, 1, 1], [], []>} : vector<2x32xf32>, vector<32x128xf32>, vector<2x128xf32> -> vector<2x128xf32>
      %60 = arith.addf %58, %59 : vector<2x128xf32>
      %61 = arith.negf %60 : vector<2x128xf32>
      %62 = math.exp %61 : vector<2x128xf32>
      %cst_38 = arith.constant 1.000000e+00 : f32
      %63 = vector.broadcast %cst_38 : f32 to vector<2x128xf32>
      %64 = arith.addf %63, %62 : vector<2x128xf32>
      %65 = arith.divf %63, %64 : vector<2x128xf32>
      %66 = vector.extract_strided_slice %65 {offsets = [0, 0], sizes = [2, 32], strides = [1, 1]} : vector<2x128xf32> to vector<2x32xf32>
      %67 = vector.extract_strided_slice %65 {offsets = [0, 32], sizes = [2, 32], strides = [1, 1]} : vector<2x128xf32> to vector<2x32xf32>
      %68 = vector.extract_strided_slice %65 {offsets = [0, 64], sizes = [2, 32], strides = [1, 1]} : vector<2x128xf32> to vector<2x32xf32>
      %69 = vector.extract_strided_slice %65 {offsets = [0, 96], sizes = [2, 32], strides = [1, 1]} : vector<2x128xf32> to vector<2x32xf32>
      %cst_39 = arith.constant 2.000000e+00 : f32
      %70 = vector.broadcast %cst_39 : f32 to vector<2x32xf32>
      %71 = arith.mulf %70, %69 : vector<2x32xf32>
      %cst_40 = arith.constant 1.000000e+00 : f32
      %72 = vector.broadcast %cst_40 : f32 to vector<2x32xf32>
      %73 = arith.subf %71, %72 : vector<2x32xf32>
      %74 = arith.mulf %67, %45 : vector<2x32xf32>
      %75 = arith.mulf %66, %73 : vector<2x32xf32>
      %76 = arith.addf %74, %75 : vector<2x32xf32>
      %77 = math.tanh %76 : vector<2x32xf32>
      %78 = arith.mulf %68, %77 : vector<2x32xf32>
      %c1_i32_41 = arith.constant 1 : i32
      %79 = vector.broadcast %c1_i32_41 : i32 to vector<1x8x1xi32>
      %80 = arith.cmpi eq, %12, %79 : vector<1x8x1xi32>
      %81 = vector.shape_cast %78 : vector<2x32xf32> to vector<2x1x32xf32>
      %82 = vector.shape_cast %81 : vector<2x1x32xf32> to vector<2x1x32xf32>
      %83 = vector.broadcast %82 : vector<2x1x32xf32> to vector<2x8x32xf32>
      %84 = vector.shape_cast %80 : vector<1x8x1xi1> to vector<1x8x1xi1>
      %85 = vector.broadcast %84 : vector<1x8x1xi1> to vector<2x8x32xi1>
      %86 = arith.select %85, %83, %55 : vector<2x8x32xi1>, vector<2x8x32xf32>
      %c4_i32 = arith.constant 4 : i32
      %87 = arith.addi %23, %c4_i32 : i32
      %88 = arith.index_cast %87 : i32 to index
      %c0_42 = arith.constant 0 : index
      %89 = vector.load %arg9[%88, %c0_42] : memref<256x128xf32, #tpu.memory_space<vmem>>, vector<2x128xf32>
      %cst_43 = arith.constant dense<0.000000e+00> : vector<2x128xf32>
      %90 = tpu.matmul %78, %3, %cst_43 {dimension_numbers = #tpu.dot_dimension_numbers<[1], [0], [0], [1], [0, 0, 1, 1], [], []>} : vector<2x32xf32>, vector<32x128xf32>, vector<2x128xf32> -> vector<2x128xf32>
      %91 = arith.addf %89, %90 : vector<2x128xf32>
      %92 = arith.negf %91 : vector<2x128xf32>
      %93 = math.exp %92 : vector<2x128xf32>
      %cst_44 = arith.constant 1.000000e+00 : f32
      %94 = vector.broadcast %cst_44 : f32 to vector<2x128xf32>
      %95 = arith.addf %94, %93 : vector<2x128xf32>
      %96 = arith.divf %94, %95 : vector<2x128xf32>
      %97 = vector.extract_strided_slice %96 {offsets = [0, 0], sizes = [2, 32], strides = [1, 1]} : vector<2x128xf32> to vector<2x32xf32>
      %98 = vector.extract_strided_slice %96 {offsets = [0, 32], sizes = [2, 32], strides = [1, 1]} : vector<2x128xf32> to vector<2x32xf32>
      %99 = vector.extract_strided_slice %96 {offsets = [0, 64], sizes = [2, 32], strides = [1, 1]} : vector<2x128xf32> to vector<2x32xf32>
      %100 = vector.extract_strided_slice %96 {offsets = [0, 96], sizes = [2, 32], strides = [1, 1]} : vector<2x128xf32> to vector<2x32xf32>
      %cst_45 = arith.constant 2.000000e+00 : f32
      %101 = vector.broadcast %cst_45 : f32 to vector<2x32xf32>
      %102 = arith.mulf %101, %100 : vector<2x32xf32>
      %cst_46 = arith.constant 1.000000e+00 : f32
      %103 = vector.broadcast %cst_46 : f32 to vector<2x32xf32>
      %104 = arith.subf %102, %103 : vector<2x32xf32>
      %105 = arith.mulf %98, %76 : vector<2x32xf32>
      %106 = arith.mulf %97, %104 : vector<2x32xf32>
      %107 = arith.addf %105, %106 : vector<2x32xf32>
      %108 = math.tanh %107 : vector<2x32xf32>
      %109 = arith.mulf %99, %108 : vector<2x32xf32>
      %c2_i32_47 = arith.constant 2 : i32
      %110 = vector.broadcast %c2_i32_47 : i32 to vector<1x8x1xi32>
      %111 = arith.cmpi eq, %12, %110 : vector<1x8x1xi32>
      %112 = vector.shape_cast %109 : vector<2x32xf32> to vector<2x1x32xf32>
      %113 = vector.shape_cast %112 : vector<2x1x32xf32> to vector<2x1x32xf32>
      %114 = vector.broadcast %113 : vector<2x1x32xf32> to vector<2x8x32xf32>
      %115 = vector.shape_cast %111 : vector<1x8x1xi1> to vector<1x8x1xi1>
      %116 = vector.broadcast %115 : vector<1x8x1xi1> to vector<2x8x32xi1>
      %117 = arith.select %116, %114, %86 : vector<2x8x32xi1>, vector<2x8x32xf32>
      %c6_i32 = arith.constant 6 : i32
      %118 = arith.addi %23, %c6_i32 : i32
      %119 = arith.index_cast %118 : i32 to index
      %c0_48 = arith.constant 0 : index
      %120 = vector.load %arg9[%119, %c0_48] : memref<256x128xf32, #tpu.memory_space<vmem>>, vector<2x128xf32>
      %cst_49 = arith.constant dense<0.000000e+00> : vector<2x128xf32>
      %121 = tpu.matmul %109, %3, %cst_49 {dimension_numbers = #tpu.dot_dimension_numbers<[1], [0], [0], [1], [0, 0, 1, 1], [], []>} : vector<2x32xf32>, vector<32x128xf32>, vector<2x128xf32> -> vector<2x128xf32>
      %122 = arith.addf %120, %121 : vector<2x128xf32>
      %123 = arith.negf %122 : vector<2x128xf32>
      %124 = math.exp %123 : vector<2x128xf32>
      %cst_50 = arith.constant 1.000000e+00 : f32
      %125 = vector.broadcast %cst_50 : f32 to vector<2x128xf32>
      %126 = arith.addf %125, %124 : vector<2x128xf32>
      %127 = arith.divf %125, %126 : vector<2x128xf32>
      %128 = vector.extract_strided_slice %127 {offsets = [0, 0], sizes = [2, 32], strides = [1, 1]} : vector<2x128xf32> to vector<2x32xf32>
      %129 = vector.extract_strided_slice %127 {offsets = [0, 32], sizes = [2, 32], strides = [1, 1]} : vector<2x128xf32> to vector<2x32xf32>
      %130 = vector.extract_strided_slice %127 {offsets = [0, 64], sizes = [2, 32], strides = [1, 1]} : vector<2x128xf32> to vector<2x32xf32>
      %131 = vector.extract_strided_slice %127 {offsets = [0, 96], sizes = [2, 32], strides = [1, 1]} : vector<2x128xf32> to vector<2x32xf32>
      %cst_51 = arith.constant 2.000000e+00 : f32
      %132 = vector.broadcast %cst_51 : f32 to vector<2x32xf32>
      %133 = arith.mulf %132, %131 : vector<2x32xf32>
      %cst_52 = arith.constant 1.000000e+00 : f32
      %134 = vector.broadcast %cst_52 : f32 to vector<2x32xf32>
      %135 = arith.subf %133, %134 : vector<2x32xf32>
      %136 = arith.mulf %129, %107 : vector<2x32xf32>
      %137 = arith.mulf %128, %135 : vector<2x32xf32>
      %138 = arith.addf %136, %137 : vector<2x32xf32>
      %139 = math.tanh %138 : vector<2x32xf32>
      %140 = arith.mulf %130, %139 : vector<2x32xf32>
      %c3_i32 = arith.constant 3 : i32
      %141 = vector.broadcast %c3_i32 : i32 to vector<1x8x1xi32>
      %142 = arith.cmpi eq, %12, %141 : vector<1x8x1xi32>
      %143 = vector.shape_cast %140 : vector<2x32xf32> to vector<2x1x32xf32>
      %144 = vector.shape_cast %143 : vector<2x1x32xf32> to vector<2x1x32xf32>
      %145 = vector.broadcast %144 : vector<2x1x32xf32> to vector<2x8x32xf32>
      %146 = vector.shape_cast %142 : vector<1x8x1xi1> to vector<1x8x1xi1>
      %147 = vector.broadcast %146 : vector<1x8x1xi1> to vector<2x8x32xi1>
      %148 = arith.select %147, %145, %117 : vector<2x8x32xi1>, vector<2x8x32xf32>
      %c8_i32 = arith.constant 8 : i32
      %149 = arith.addi %23, %c8_i32 : i32
      %150 = arith.index_cast %149 : i32 to index
      %c0_53 = arith.constant 0 : index
      %151 = vector.load %arg9[%150, %c0_53] : memref<256x128xf32, #tpu.memory_space<vmem>>, vector<2x128xf32>
      %cst_54 = arith.constant dense<0.000000e+00> : vector<2x128xf32>
      %152 = tpu.matmul %140, %3, %cst_54 {dimension_numbers = #tpu.dot_dimension_numbers<[1], [0], [0], [1], [0, 0, 1, 1], [], []>} : vector<2x32xf32>, vector<32x128xf32>, vector<2x128xf32> -> vector<2x128xf32>
      %153 = arith.addf %151, %152 : vector<2x128xf32>
      %154 = arith.negf %153 : vector<2x128xf32>
      %155 = math.exp %154 : vector<2x128xf32>
      %cst_55 = arith.constant 1.000000e+00 : f32
      %156 = vector.broadcast %cst_55 : f32 to vector<2x128xf32>
      %157 = arith.addf %156, %155 : vector<2x128xf32>
      %158 = arith.divf %156, %157 : vector<2x128xf32>
      %159 = vector.extract_strided_slice %158 {offsets = [0, 0], sizes = [2, 32], strides = [1, 1]} : vector<2x128xf32> to vector<2x32xf32>
      %160 = vector.extract_strided_slice %158 {offsets = [0, 32], sizes = [2, 32], strides = [1, 1]} : vector<2x128xf32> to vector<2x32xf32>
      %161 = vector.extract_strided_slice %158 {offsets = [0, 64], sizes = [2, 32], strides = [1, 1]} : vector<2x128xf32> to vector<2x32xf32>
      %162 = vector.extract_strided_slice %158 {offsets = [0, 96], sizes = [2, 32], strides = [1, 1]} : vector<2x128xf32> to vector<2x32xf32>
      %cst_56 = arith.constant 2.000000e+00 : f32
      %163 = vector.broadcast %cst_56 : f32 to vector<2x32xf32>
      %164 = arith.mulf %163, %162 : vector<2x32xf32>
      %cst_57 = arith.constant 1.000000e+00 : f32
      %165 = vector.broadcast %cst_57 : f32 to vector<2x32xf32>
      %166 = arith.subf %164, %165 : vector<2x32xf32>
      %167 = arith.mulf %160, %138 : vector<2x32xf32>
      %168 = arith.mulf %159, %166 : vector<2x32xf32>
      %169 = arith.addf %167, %168 : vector<2x32xf32>
      %170 = math.tanh %169 : vector<2x32xf32>
      %171 = arith.mulf %161, %170 : vector<2x32xf32>
      %c4_i32_58 = arith.constant 4 : i32
      %172 = vector.broadcast %c4_i32_58 : i32 to vector<1x8x1xi32>
      %173 = arith.cmpi eq, %12, %172 : vector<1x8x1xi32>
      %174 = vector.shape_cast %171 : vector<2x32xf32> to vector<2x1x32xf32>
      %175 = vector.shape_cast %174 : vector<2x1x32xf32> to vector<2x1x32xf32>
      %176 = vector.broadcast %175 : vector<2x1x32xf32> to vector<2x8x32xf32>
      %177 = vector.shape_cast %173 : vector<1x8x1xi1> to vector<1x8x1xi1>
      %178 = vector.broadcast %177 : vector<1x8x1xi1> to vector<2x8x32xi1>
      %179 = arith.select %178, %176, %148 : vector<2x8x32xi1>, vector<2x8x32xf32>
      %c10_i32 = arith.constant 10 : i32
      %180 = arith.addi %23, %c10_i32 : i32
      %181 = arith.index_cast %180 : i32 to index
      %c0_59 = arith.constant 0 : index
      %182 = vector.load %arg9[%181, %c0_59] : memref<256x128xf32, #tpu.memory_space<vmem>>, vector<2x128xf32>
      %cst_60 = arith.constant dense<0.000000e+00> : vector<2x128xf32>
      %183 = tpu.matmul %171, %3, %cst_60 {dimension_numbers = #tpu.dot_dimension_numbers<[1], [0], [0], [1], [0, 0, 1, 1], [], []>} : vector<2x32xf32>, vector<32x128xf32>, vector<2x128xf32> -> vector<2x128xf32>
      %184 = arith.addf %182, %183 : vector<2x128xf32>
      %185 = arith.negf %184 : vector<2x128xf32>
      %186 = math.exp %185 : vector<2x128xf32>
      %cst_61 = arith.constant 1.000000e+00 : f32
      %187 = vector.broadcast %cst_61 : f32 to vector<2x128xf32>
      %188 = arith.addf %187, %186 : vector<2x128xf32>
      %189 = arith.divf %187, %188 : vector<2x128xf32>
      %190 = vector.extract_strided_slice %189 {offsets = [0, 0], sizes = [2, 32], strides = [1, 1]} : vector<2x128xf32> to vector<2x32xf32>
      %191 = vector.extract_strided_slice %189 {offsets = [0, 32], sizes = [2, 32], strides = [1, 1]} : vector<2x128xf32> to vector<2x32xf32>
      %192 = vector.extract_strided_slice %189 {offsets = [0, 64], sizes = [2, 32], strides = [1, 1]} : vector<2x128xf32> to vector<2x32xf32>
      %193 = vector.extract_strided_slice %189 {offsets = [0, 96], sizes = [2, 32], strides = [1, 1]} : vector<2x128xf32> to vector<2x32xf32>
      %cst_62 = arith.constant 2.000000e+00 : f32
      %194 = vector.broadcast %cst_62 : f32 to vector<2x32xf32>
      %195 = arith.mulf %194, %193 : vector<2x32xf32>
      %cst_63 = arith.constant 1.000000e+00 : f32
      %196 = vector.broadcast %cst_63 : f32 to vector<2x32xf32>
      %197 = arith.subf %195, %196 : vector<2x32xf32>
      %198 = arith.mulf %191, %169 : vector<2x32xf32>
      %199 = arith.mulf %190, %197 : vector<2x32xf32>
      %200 = arith.addf %198, %199 : vector<2x32xf32>
      %201 = math.tanh %200 : vector<2x32xf32>
      %202 = arith.mulf %192, %201 : vector<2x32xf32>
      %c5_i32 = arith.constant 5 : i32
      %203 = vector.broadcast %c5_i32 : i32 to vector<1x8x1xi32>
      %204 = arith.cmpi eq, %12, %203 : vector<1x8x1xi32>
      %205 = vector.shape_cast %202 : vector<2x32xf32> to vector<2x1x32xf32>
      %206 = vector.shape_cast %205 : vector<2x1x32xf32> to vector<2x1x32xf32>
      %207 = vector.broadcast %206 : vector<2x1x32xf32> to vector<2x8x32xf32>
      %208 = vector.shape_cast %204 : vector<1x8x1xi1> to vector<1x8x1xi1>
      %209 = vector.broadcast %208 : vector<1x8x1xi1> to vector<2x8x32xi1>
      %210 = arith.select %209, %207, %179 : vector<2x8x32xi1>, vector<2x8x32xf32>
      %c12_i32 = arith.constant 12 : i32
      %211 = arith.addi %23, %c12_i32 : i32
      %212 = arith.index_cast %211 : i32 to index
      %c0_64 = arith.constant 0 : index
      %213 = vector.load %arg9[%212, %c0_64] : memref<256x128xf32, #tpu.memory_space<vmem>>, vector<2x128xf32>
      %cst_65 = arith.constant dense<0.000000e+00> : vector<2x128xf32>
      %214 = tpu.matmul %202, %3, %cst_65 {dimension_numbers = #tpu.dot_dimension_numbers<[1], [0], [0], [1], [0, 0, 1, 1], [], []>} : vector<2x32xf32>, vector<32x128xf32>, vector<2x128xf32> -> vector<2x128xf32>
      %215 = arith.addf %213, %214 : vector<2x128xf32>
      %216 = arith.negf %215 : vector<2x128xf32>
      %217 = math.exp %216 : vector<2x128xf32>
      %cst_66 = arith.constant 1.000000e+00 : f32
      %218 = vector.broadcast %cst_66 : f32 to vector<2x128xf32>
      %219 = arith.addf %218, %217 : vector<2x128xf32>
      %220 = arith.divf %218, %219 : vector<2x128xf32>
      %221 = vector.extract_strided_slice %220 {offsets = [0, 0], sizes = [2, 32], strides = [1, 1]} : vector<2x128xf32> to vector<2x32xf32>
      %222 = vector.extract_strided_slice %220 {offsets = [0, 32], sizes = [2, 32], strides = [1, 1]} : vector<2x128xf32> to vector<2x32xf32>
      %223 = vector.extract_strided_slice %220 {offsets = [0, 64], sizes = [2, 32], strides = [1, 1]} : vector<2x128xf32> to vector<2x32xf32>
      %224 = vector.extract_strided_slice %220 {offsets = [0, 96], sizes = [2, 32], strides = [1, 1]} : vector<2x128xf32> to vector<2x32xf32>
      %cst_67 = arith.constant 2.000000e+00 : f32
      %225 = vector.broadcast %cst_67 : f32 to vector<2x32xf32>
      %226 = arith.mulf %225, %224 : vector<2x32xf32>
      %cst_68 = arith.constant 1.000000e+00 : f32
      %227 = vector.broadcast %cst_68 : f32 to vector<2x32xf32>
      %228 = arith.subf %226, %227 : vector<2x32xf32>
      %229 = arith.mulf %222, %200 : vector<2x32xf32>
      %230 = arith.mulf %221, %228 : vector<2x32xf32>
      %231 = arith.addf %229, %230 : vector<2x32xf32>
      %232 = math.tanh %231 : vector<2x32xf32>
      %233 = arith.mulf %223, %232 : vector<2x32xf32>
      %c6_i32_69 = arith.constant 6 : i32
      %234 = vector.broadcast %c6_i32_69 : i32 to vector<1x8x1xi32>
      %235 = arith.cmpi eq, %12, %234 : vector<1x8x1xi32>
      %236 = vector.shape_cast %233 : vector<2x32xf32> to vector<2x1x32xf32>
      %237 = vector.shape_cast %236 : vector<2x1x32xf32> to vector<2x1x32xf32>
      %238 = vector.broadcast %237 : vector<2x1x32xf32> to vector<2x8x32xf32>
      %239 = vector.shape_cast %235 : vector<1x8x1xi1> to vector<1x8x1xi1>
      %240 = vector.broadcast %239 : vector<1x8x1xi1> to vector<2x8x32xi1>
      %241 = arith.select %240, %238, %210 : vector<2x8x32xi1>, vector<2x8x32xf32>
      %c14_i32 = arith.constant 14 : i32
      %242 = arith.addi %23, %c14_i32 : i32
      %243 = arith.index_cast %242 : i32 to index
      %c0_70 = arith.constant 0 : index
      %244 = vector.load %arg9[%243, %c0_70] : memref<256x128xf32, #tpu.memory_space<vmem>>, vector<2x128xf32>
      %cst_71 = arith.constant dense<0.000000e+00> : vector<2x128xf32>
      %245 = tpu.matmul %233, %3, %cst_71 {dimension_numbers = #tpu.dot_dimension_numbers<[1], [0], [0], [1], [0, 0, 1, 1], [], []>} : vector<2x32xf32>, vector<32x128xf32>, vector<2x128xf32> -> vector<2x128xf32>
      %246 = arith.addf %244, %245 : vector<2x128xf32>
      %247 = arith.negf %246 : vector<2x128xf32>
      %248 = math.exp %247 : vector<2x128xf32>
      %cst_72 = arith.constant 1.000000e+00 : f32
      %249 = vector.broadcast %cst_72 : f32 to vector<2x128xf32>
      %250 = arith.addf %249, %248 : vector<2x128xf32>
      %251 = arith.divf %249, %250 : vector<2x128xf32>
      %252 = vector.extract_strided_slice %251 {offsets = [0, 0], sizes = [2, 32], strides = [1, 1]} : vector<2x128xf32> to vector<2x32xf32>
      %253 = vector.extract_strided_slice %251 {offsets = [0, 32], sizes = [2, 32], strides = [1, 1]} : vector<2x128xf32> to vector<2x32xf32>
      %254 = vector.extract_strided_slice %251 {offsets = [0, 64], sizes = [2, 32], strides = [1, 1]} : vector<2x128xf32> to vector<2x32xf32>
      %255 = vector.extract_strided_slice %251 {offsets = [0, 96], sizes = [2, 32], strides = [1, 1]} : vector<2x128xf32> to vector<2x32xf32>
      %cst_73 = arith.constant 2.000000e+00 : f32
      %256 = vector.broadcast %cst_73 : f32 to vector<2x32xf32>
      %257 = arith.mulf %256, %255 : vector<2x32xf32>
      %cst_74 = arith.constant 1.000000e+00 : f32
      %258 = vector.broadcast %cst_74 : f32 to vector<2x32xf32>
      %259 = arith.subf %257, %258 : vector<2x32xf32>
      %260 = arith.mulf %253, %231 : vector<2x32xf32>
      %261 = arith.mulf %252, %259 : vector<2x32xf32>
      %262 = arith.addf %260, %261 : vector<2x32xf32>
      %263 = math.tanh %262 : vector<2x32xf32>
      %264 = arith.mulf %254, %263 : vector<2x32xf32>
      %c7_i32 = arith.constant 7 : i32
      %265 = vector.broadcast %c7_i32 : i32 to vector<1x8x1xi32>
      %266 = arith.cmpi eq, %12, %265 : vector<1x8x1xi32>
      %267 = vector.shape_cast %264 : vector<2x32xf32> to vector<2x1x32xf32>
      %268 = vector.shape_cast %267 : vector<2x1x32xf32> to vector<2x1x32xf32>
      %269 = vector.broadcast %268 : vector<2x1x32xf32> to vector<2x8x32xf32>
      %270 = vector.shape_cast %266 : vector<1x8x1xi1> to vector<1x8x1xi1>
      %271 = vector.broadcast %270 : vector<1x8x1xi1> to vector<2x8x32xi1>
      %272 = arith.select %271, %269, %241 : vector<2x8x32xi1>, vector<2x8x32xf32>
      %c8_i32_75 = arith.constant 8 : i32
      %273 = arith.muli %arg11, %c8_i32_75 : i32
      %274 = tpu.assume_multiple %273, 8 : i32
      %c0_76 = arith.constant 0 : index
      %275 = arith.index_cast %274 : i32 to index
      %c0_77 = arith.constant 0 : index
      %276 = vector.load %arg10[%c0_76, %275, %c0_77] : memref<2x128x32xf32, #tpu.memory_space<vmem>>, vector<2x8x32xf32>
      tpu.vector_store %arg10[%c0_76, %275, %c0_77], %272 {strides = array<i32>} : memref<2x128x32xf32, #tpu.memory_space<vmem>>, vector<2x8x32xf32>,
      scf.yield %264, %262 : vector<2x32xf32>, vector<2x32xf32>
    }
    %c16_i32_16 = arith.constant 16 : i32
    %c0_17 = arith.constant 0 : index
    %c0_18 = arith.constant 0 : index
    %17 = vector.load %arg7[%c0_17, %c0_18] : memref<2x32xf32, #tpu.memory_space<vmem>>, vector<2x32xf32>
    tpu.vector_store %arg7[%c0_17, %c0_18], %16#0 {strides = array<i32>} : memref<2x32xf32, #tpu.memory_space<vmem>>, vector<2x32xf32>,
    %c0_19 = arith.constant 0 : index
    %c0_20 = arith.constant 0 : index
    %18 = vector.load %arg8[%c0_19, %c0_20] : memref<2x32xf32, #tpu.memory_space<vmem>>, vector<2x32xf32>
    tpu.vector_store %arg8[%c0_19, %c0_20], %16#1 {strides = array<i32>} : memref<2x32xf32, #tpu.memory_space<vmem>>, vector<2x32xf32>,
    %c0_21 = arith.constant 0 : index
    %c0_22 = arith.constant 0 : index
    %c0_23 = arith.constant 0 : index
    %19 = vector.load %arg10[%c0_21, %c0_22, %c0_23] : memref<2x128x32xf32, #tpu.memory_space<vmem>>, vector<2x128x32xf32>
    %20 = tpu.transpose %19, [0, 2, 1] : vector<2x128x32xf32> -> vector<2x32x128xf32>
    %c0_24 = arith.constant 0 : index
    %c0_25 = arith.constant 0 : index
    %c0_26 = arith.constant 0 : index
    %21 = vector.load %arg6[%c0_24, %c0_25, %c0_26] : memref<2x32x128xf32, #tpu.memory_space<vmem>>, vector<2x32x128xf32>
    tpu.vector_store %arg6[%c0_24, %c0_25, %c0_26], %20 {strides = array<i32>} : memref<2x32x128xf32, #tpu.memory_space<vmem>>, vector<2x32x128xf32>,
    return
  }
  func.func @transform_0(%arg0: i32, %arg1: i32) -> (i32, i32, i32) {
    %c0_i32 = arith.constant 0 : i32
    %c0_i32_0 = arith.constant 0 : i32
    return %arg0, %arg1, %c0_i32 : i32, i32, i32
  }
  func.func @transform_1(%arg0: i32, %arg1: i32) -> (i32, i32) {
    %c0_i32 = arith.constant 0 : i32
    %c0_i32_0 = arith.constant 0 : i32
    %c0_i32_1 = arith.constant 0 : i32
    return %c0_i32, %c0_i32_0 : i32, i32
  }
  func.func @transform_2(%arg0: i32, %arg1: i32) -> (i32, i32) {
    %c0_i32 = arith.constant 0 : i32
    %c0_i32_0 = arith.constant 0 : i32
    %c0_i32_1 = arith.constant 0 : i32
    return %c0_i32, %c0_i32_0 : i32, i32
  }
  func.func @transform_3(%arg0: i32, %arg1: i32) -> (i32, i32) {
    %c0_i32 = arith.constant 0 : i32
    %c0_i32_0 = arith.constant 0 : i32
    %c0_i32_1 = arith.constant 0 : i32
    return %c0_i32, %c0_i32_0 : i32, i32
  }
  func.func @transform_4(%arg0: i32, %arg1: i32) -> (i32, i32, i32) {
    %c0_i32 = arith.constant 0 : i32
    %c0_i32_0 = arith.constant 0 : i32
    return %arg0, %c0_i32, %arg1 : i32, i32, i32
  }
}

</mosaic_0001>

<llo_original>
// kernel: conv_lstm_forward.1
$region0: #{conv_lstm_forward.1}
  #allocation0 [shape = 'u32[]', space=smem, size = 0x4, offset = 0x4, fixed_abs, tag = 'smem constant byte address 0x4 - core index']
  #allocation1 [shape = 'u32[72,128]{1,0:T(1,128)}', space=vmem, size = 0x9000, scoped, tag = 'internal scratch']
  #allocation2 [shape = 'f32[2,32]{1,0:T(2,128)}', space=vmem, size = 0x400, scoped, tag = 'scratch operand']
  #allocation3 [shape = 'f32[2,32]{1,0:T(2,128)}', space=vmem, size = 0x400, scoped, tag = 'scratch operand']
  #allocation4 [shape = 'f32[256,128]{1,0:T(8,128)}', space=vmem, size = 0x20000, scoped, tag = 'scratch operand']
  #allocation5 [shape = 'f32[2,128,32]{2,1,0:T(8,128)}', space=vmem, size = 0x20000, scoped, tag = 'scratch operand']
  %s0 = inlined_call_operand.vmem [shape: f32[1,256,4], index: 0, kind: input, shape index: {}]
  %s1 = inlined_call_operand.vmem [shape: f32[4,128], index: 1, kind: input, shape index: {}]
  %s2 = inlined_call_operand.vmem [shape: f32[32,128], index: 2, kind: input, shape index: {}]
  %s3 = inlined_call_operand.vmem [shape: f32[1,128], index: 3, kind: input, shape index: {}]
  %s4 = inlined_call_operand.vmem [shape: f32[2,32,128], index: 4, kind: output, shape index: {}]
  %s5 = sld [smem:[#allocation0]]
  $region37: #{conv_lstm_forward.1} parent=0
    _
  %s7 = ssub.s32 1, %s5
  %s8 = scalar_select 0, %s7, %s5
  // Predicated region
  $region2: #{conv_lstm_forward.1} parent=0 // pred_check
    _
  $region3: #{conv_lstm_forward.1} parent=0 // pred_check_branch
    %10 = sbr.rel (0) target = $region5
  $region4: #{conv_lstm_forward.1} parent=0 // pred_region
    _
  $region5: #{conv_lstm_forward.1} parent=0 // pred_fallthru
    _
  // Predicated region
  $region6: #{conv_lstm_forward.1} parent=0 // pred_check
    _
  $region7: #{conv_lstm_forward.1} parent=0 // pred_check_branch
    %12 = sbr.rel (0) target = $region9
  $region8: #{conv_lstm_forward.1} parent=0 // pred_region
    _
  $region9: #{conv_lstm_forward.1} parent=0 // pred_fallthru
    _
  // Predicated region
  $region10: #{conv_lstm_forward.1} parent=0 // pred_check
    _
  $region11: #{conv_lstm_forward.1} parent=0 // pred_check_branch
    %14 = sbr.rel (0) target = $region13
  $region12: #{conv_lstm_forward.1} parent=0 // pred_region
    _
  $region13: #{conv_lstm_forward.1} parent=0 // pred_fallthru
    _
  // Predicated region
  $region14: #{conv_lstm_forward.1} parent=0 // pred_check
    _
  $region15: #{conv_lstm_forward.1} parent=0 // pred_check_branch
    %16 = sbr.rel (0) target = $region17
  $region16: #{conv_lstm_forward.1} parent=0 // pred_region
    _
  $region17: #{conv_lstm_forward.1} parent=0 // pred_fallthru
    _
  %p17 = scmp.eq.s32.totalorder 0, 0
  // Predicated region
  $region18: #{conv_lstm_forward.1} parent=0 // pred_check
    %p18 = pneg %p17
  $region19: #{conv_lstm_forward.1} parent=0 // pred_check_branch
    %20 = sbr.rel (%p18) target = $region21
  $region20: #{conv_lstm_forward.1} parent=0 // pred_region
    %vm21 = vcmask 254976
    %22 = vst.msk [vmem:[#allocation2] sm:$0x3] %vm21, 0.0
    %23 = vst.msk [vmem:[#allocation3] sm:$0x3] %vm21, 0.0
  $region21: #{conv_lstm_forward.1} parent=0 // pred_fallthru
    _
  %v24 = vld [vmem:[%s2] sm:$0xff]
  %v25 = vld [vmem:[%s2 + $0x8] sm:$0xff]
  %v26 = vld [vmem:[%s2 + $0x10] sm:$0xff]
  %v27 = vld [vmem:[%s2 + $0x18] sm:$0xff]
  %v28 = vld [vmem:[%s0] sm:$0xff]
  %v29 = vld [vmem:[%s0 + $0x8] sm:$0xff]
  %v30 = vld [vmem:[%s0 + $0x10] sm:$0xff]
  %v31 = vld [vmem:[%s0 + $0x18] sm:$0xff]
  %v32 = vld [vmem:[%s0 + $0x20] sm:$0xff]
  %v33 = vld [vmem:[%s0 + $0x28] sm:$0xff]
  %v34 = vld [vmem:[%s0 + $0x30] sm:$0xff]
  %v35 = vld [vmem:[%s0 + $0x38] sm:$0xff]
  %v36 = vld [vmem:[%s0 + $0x40] sm:$0xff]
  %v37 = vld [vmem:[%s0 + $0x48] sm:$0xff]
  %v38 = vld [vmem:[%s0 + $0x50] sm:$0xff]
  %v39 = vld [vmem:[%s0 + $0x58] sm:$0xff]
  %v40 = vld [vmem:[%s0 + $0x60] sm:$0xff]
  %v41 = vld [vmem:[%s0 + $0x68] sm:$0xff]
  %v42 = vld [vmem:[%s0 + $0x70] sm:$0xff]
  %v43 = vld [vmem:[%s0 + $0x78] sm:$0xff]
  %v44 = vld [vmem:[%s0 + $0x80] sm:$0xff]
  %v45 = vld [vmem:[%s0 + $0x88] sm:$0xff]
  %v46 = vld [vmem:[%s0 + $0x90] sm:$0xff]
  %v47 = vld [vmem:[%s0 + $0x98] sm:$0xff]
  %v48 = vld [vmem:[%s0 + $0xa0] sm:$0xff]
  %v49 = vld [vmem:[%s0 + $0xa8] sm:$0xff]
  %v50 = vld [vmem:[%s0 + $0xb0] sm:$0xff]
  %v51 = vld [vmem:[%s0 + $0xb8] sm:$0xff]
  %v52 = vld [vmem:[%s0 + $0xc0] sm:$0xff]
  %v53 = vld [vmem:[%s0 + $0xc8] sm:$0xff]
  %v54 = vld [vmem:[%s0 + $0xd0] sm:$0xff]
  %v55 = vld [vmem:[%s0 + $0xd8] sm:$0xff]
  %v56 = vld [vmem:[%s0 + $0xe0] sm:$0xff]
  %v57 = vld [vmem:[%s0 + $0xe8] sm:$0xff]
  %v58 = vld [vmem:[%s0 + $0xf0] sm:$0xff]
  %v59 = vld [vmem:[%s0 + $0xf8] sm:$0xff]
  %v60 = vld [vmem:[%s1] sm:$0xf]
  %v61 = vld [vmem:[%s3] sm:$0x1]
  %v63 = vperm.slane %v61, 0
  %vm65 = vcmask 31744
  %v67 = vsel %vm65, %v28, 0
  %v70 = vsel %vm65, %v29, 0
  %v73 = vsel %vm65, %v30, 0
  %v76 = vsel %vm65, %v31, 0
  %v79 = vsel %vm65, %v32, 0
  %v82 = vsel %vm65, %v33, 0
  %v85 = vsel %vm65, %v34, 0
  %v88 = vsel %vm65, %v35, 0
  %v91 = vsel %vm65, %v36, 0
  %v94 = vsel %vm65, %v37, 0
  %v97 = vsel %vm65, %v38, 0
  %v100 = vsel %vm65, %v39, 0
  %v103 = vsel %vm65, %v40, 0
  %v106 = vsel %vm65, %v41, 0
  %v109 = vsel %vm65, %v42, 0
  %v112 = vsel %vm65, %v43, 0
  %v115 = vsel %vm65, %v44, 0
  %v118 = vsel %vm65, %v45, 0
  %v121 = vsel %vm65, %v46, 0
  %v124 = vsel %vm65, %v47, 0
  %v127 = vsel %vm65, %v48, 0
  %v130 = vsel %vm65, %v49, 0
  %v133 = vsel %vm65, %v50, 0
  %v136 = vsel %vm65, %v51, 0
  %v139 = vsel %vm65, %v52, 0
  %v142 = vsel %vm65, %v53, 0
  %v145 = vsel %vm65, %v54, 0
  %v148 = vsel %vm65, %v55, 0
  %v151 = vsel %vm65, %v56, 0
  %v154 = vsel %vm65, %v57, 0
  %v157 = vsel %vm65, %v58, 0
  %v160 = vsel %vm65, %v59, 0
  %vm162 = vcmask 1043456
  %v164 = vsel %vm162, %v60, 0
  %166 = vmatpush.msra.mxu0 0.0
  %167 = vmatpush.msra.mxu0 0.0
  %168 = vmatpush.msra.mxu0 0.0
  %169 = vmatpush.msra.mxu0 0.0
  %170 = vmatpush.msra.mxu0 0.0
  %171 = vmatpush.msra.mxu0 0.0
  %172 = vmatpush.msra.mxu0 0.0
  %173 = vmatpush.msra.mxu0 0.0
  %174 = vmatpush.msra.mxu0 0.0
  %175 = vmatpush.msra.mxu0 0.0
  %176 = vmatpush.msra.mxu0 0.0
  %177 = vmatpush.msra.mxu0 0.0
  %178 = vmatpush.msra.mxu0 0.0
  %179 = vmatpush.msra.mxu0 0.0
  %180 = vmatpush.msra.mxu0 0.0
  %181 = vmatpush.msra.mxu0 %v164
  %182 = vmatmul.f32.gmra.mxu0 %v67
  %v183 = vpop.f32.mrf.mxu0
  %v184 = vadd.f32 %v63, %v183
  %185 = vmatmul.f32.gmra.mxu0 %v70
  %v186 = vpop.f32.mrf.mxu0
  %v187 = vadd.f32 %v63, %v186
  %188 = vmatmul.f32.gmra.mxu0 %v73
  %v189 = vpop.f32.mrf.mxu0
  %v190 = vadd.f32 %v63, %v189
  %191 = vmatmul.f32.gmra.mxu0 %v76
  %v192 = vpop.f32.mrf.mxu0
  %v193 = vadd.f32 %v63, %v192
  %194 = vmatmul.f32.gmra.mxu0 %v79
  %v195 = vpop.f32.mrf.mxu0
  %v196 = vadd.f32 %v63, %v195
  %197 = vmatmul.f32.gmra.mxu0 %v82
  %v198 = vpop.f32.mrf.mxu0
  %v199 = vadd.f32 %v63, %v198
  %200 = vmatmul.f32.gmra.mxu0 %v85
  %v201 = vpop.f32.mrf.mxu0
  %v202 = vadd.f32 %v63, %v201
  %203 = vmatmul.f32.gmra.mxu0 %v88
  %v204 = vpop.f32.mrf.mxu0
  %v205 = vadd.f32 %v63, %v204
  %206 = vmatmul.f32.gmra.mxu0 %v91
  %v207 = vpop.f32.mrf.mxu0
  %v208 = vadd.f32 %v63, %v207
  %209 = vmatmul.f32.gmra.mxu0 %v94
  %v210 = vpop.f32.mrf.mxu0
  %v211 = vadd.f32 %v63, %v210
  %212 = vmatmul.f32.gmra.mxu0 %v97
  %v213 = vpop.f32.mrf.mxu0
  %v214 = vadd.f32 %v63, %v213
  %215 = vmatmul.f32.gmra.mxu0 %v100
  %v216 = vpop.f32.mrf.mxu0
  %v217 = vadd.f32 %v63, %v216
  %218 = vmatmul.f32.gmra.mxu0 %v103
  %v219 = vpop.f32.mrf.mxu0
  %v220 = vadd.f32 %v63, %v219
  %221 = vmatmul.f32.gmra.mxu0 %v106
  %v222 = vpop.f32.mrf.mxu0
  %v223 = vadd.f32 %v63, %v222
  %224 = vmatmul.f32.gmra.mxu0 %v109
  %v225 = vpop.f32.mrf.mxu0
  %v226 = vadd.f32 %v63, %v225
  %227 = vmatmul.f32.gmra.mxu0 %v112
  %v228 = vpop.f32.mrf.mxu0
  %v229 = vadd.f32 %v63, %v228
  %230 = vmatmul.f32.gmra.mxu0 %v115
  %v231 = vpop.f32.mrf.mxu0
  %v232 = vadd.f32 %v63, %v231
  %233 = vmatmul.f32.gmra.mxu0 %v118
  %v234 = vpop.f32.mrf.mxu0
  %v235 = vadd.f32 %v63, %v234
  %236 = vmatmul.f32.gmra.mxu0 %v121
  %v237 = vpop.f32.mrf.mxu0
  %v238 = vadd.f32 %v63, %v237
  %239 = vmatmul.f32.gmra.mxu0 %v124
  %v240 = vpop.f32.mrf.mxu0
  %v241 = vadd.f32 %v63, %v240
  %242 = vmatmul.f32.gmra.mxu0 %v127
  %v243 = vpop.f32.mrf.mxu0
  %v244 = vadd.f32 %v63, %v243
  %245 = vmatmul.f32.gmra.mxu0 %v130
  %v246 = vpop.f32.mrf.mxu0
  %v247 = vadd.f32 %v63, %v246
  %248 = vmatmul.f32.gmra.mxu0 %v133
  %v249 = vpop.f32.mrf.mxu0
  %v250 = vadd.f32 %v63, %v249
  %251 = vmatmul.f32.gmra.mxu0 %v136
  %v252 = vpop.f32.mrf.mxu0
  %v253 = vadd.f32 %v63, %v252
  %254 = vmatmul.f32.gmra.mxu0 %v139
  %v255 = vpop.f32.mrf.mxu0
  %v256 = vadd.f32 %v63, %v255
  %257 = vmatmul.f32.gmra.mxu0 %v142
  %v258 = vpop.f32.mrf.mxu0
  %v259 = vadd.f32 %v63, %v258
  %260 = vmatmul.f32.gmra.mxu0 %v145
  %v261 = vpop.f32.mrf.mxu0
  %v262 = vadd.f32 %v63, %v261
  %263 = vmatmul.f32.gmra.mxu0 %v148
  %v264 = vpop.f32.mrf.mxu0
  %v265 = vadd.f32 %v63, %v264
  %266 = vmatmul.f32.gmra.mxu0 %v151
  %v267 = vpop.f32.mrf.mxu0
  %v268 = vadd.f32 %v63, %v267
  %269 = vmatmul.f32.gmra.mxu0 %v154
  %v270 = vpop.f32.mrf.mxu0
  %v271 = vadd.f32 %v63, %v270
  %272 = vmatmul.f32.gmra.mxu0 %v157
  %v273 = vpop.f32.mrf.mxu0
  %v274 = vadd.f32 %v63, %v273
  %275 = vmatmul.f32.gmra.mxu0 %v160
  %v276 = vpop.f32.mrf.mxu0
  %v277 = vadd.f32 %v63, %v276
  %278 = vdwg.mxu0
  %279 = vst [vmem:[#allocation4] sm:$0xff] %v184
  %280 = vst [vmem:[#allocation4 + $0x8] sm:$0xff] %v187
  %281 = vst [vmem:[#allocation4 + $0x10] sm:$0xff] %v190
  %282 = vst [vmem:[#allocation4 + $0x18] sm:$0xff] %v193
  %283 = vst [vmem:[#allocation4 + $0x20] sm:$0xff] %v196
  %284 = vst [vmem:[#allocation4 + $0x28] sm:$0xff] %v199
  %285 = vst [vmem:[#allocation4 + $0x30] sm:$0xff] %v202
  %286 = vst [vmem:[#allocation4 + $0x38] sm:$0xff] %v205
  %287 = vst [vmem:[#allocation4 + $0x40] sm:$0xff] %v208
  %288 = vst [vmem:[#allocation4 + $0x48] sm:$0xff] %v211
  %289 = vst [vmem:[#allocation4 + $0x50] sm:$0xff] %v214
  %290 = vst [vmem:[#allocation4 + $0x58] sm:$0xff] %v217
  %291 = vst [vmem:[#allocation4 + $0x60] sm:$0xff] %v220
  %292 = vst [vmem:[#allocation4 + $0x68] sm:$0xff] %v223
  %293 = vst [vmem:[#allocation4 + $0x70] sm:$0xff] %v226
  %294 = vst [vmem:[#allocation4 + $0x78] sm:$0xff] %v229
  %295 = vst [vmem:[#allocation4 + $0x80] sm:$0xff] %v232
  %296 = vst [vmem:[#allocation4 + $0x88] sm:$0xff] %v235
  %297 = vst [vmem:[#allocation4 + $0x90] sm:$0xff] %v238
  %298 = vst [vmem:[#allocation4 + $0x98] sm:$0xff] %v241
  %299 = vst [vmem:[#allocation4 + $0xa0] sm:$0xff] %v244
  %300 = vst [vmem:[#allocation4 + $0xa8] sm:$0xff] %v247
  %301 = vst [vmem:[#allocation4 + $0xb0] sm:$0xff] %v250
  %302 = vst [vmem:[#allocation4 + $0xb8] sm:$0xff] %v253
  %303 = vst [vmem:[#allocation4 + $0xc0] sm:$0xff] %v256
  %304 = vst [vmem:[#allocation4 + $0xc8] sm:$0xff] %v259
  %305 = vst [vmem:[#allocation4 + $0xd0] sm:$0xff] %v262
  %306 = vst [vmem:[#allocation4 + $0xd8] sm:$0xff] %v265
  %307 = vst [vmem:[#allocation4 + $0xe0] sm:$0xff] %v268
  %308 = vst [vmem:[#allocation4 + $0xe8] sm:$0xff] %v271
  %309 = vst [vmem:[#allocation4 + $0xf0] sm:$0xff] %v274
  %310 = vst [vmem:[#allocation4 + $0xf8] sm:$0xff] %v277
  %v311 = vlaneseq
  %v312 = vshrl.u32 %v311, 7
  %v313 = vld [vmem:[#allocation2] sm:$0x3]
  %v314 = vld [vmem:[#allocation3] sm:$0x3]
  loop: start=0, step=1, limit=16
  $region22: #{conv_lstm_forward.1} parent=0 // loop_pre_header
    _
  $region23: #{conv_lstm_forward.1} parent=0 // loop_header
    %s316 = sphi 0, %s320
    %p317 = scmp.ge.s32.totalorder %s316, 16
    %v321 = vphi %v313, %v956
    %v322 = vphi %v314, %v960
  $region24: #{conv_lstm_forward.1} parent=0 // loop_header_branch
    %319 = sbr.rel (%p317) target = $region28
  $region25: #{conv_lstm_forward.1} parent=0 // loop_body
    %s323 = smul.u32 %s316, 16
    %s324 = scalar_lea.vmem [#allocation4], %s323
    %v325 = vld [vmem:[%s324] sm:$0x3]
    %vm326 = vcmask 261120
    %v328 = vsel %vm326, %v321, 0
    %330 = vmatpush.msra.mxu0 0.0
    %331 = vmatpush.msra.mxu0 0.0
    %332 = vmatpush.msra.mxu0 0.0
    %333 = vmatpush.msra.mxu0 0.0
    %334 = vmatpush.msra.mxu0 0.0
    %335 = vmatpush.msra.mxu0 0.0
    %336 = vmatpush.msra.mxu0 0.0
    %337 = vmatpush.msra.mxu0 0.0
    %338 = vmatpush.msra.mxu0 0.0
    %339 = vmatpush.msra.mxu0 0.0
    %340 = vmatpush.msra.mxu0 0.0
    %341 = vmatpush.msra.mxu0 0.0
    %342 = vmatpush.msra.mxu0 %v27
    %343 = vmatpush.msra.mxu0 %v26
    %344 = vmatpush.msra.mxu0 %v25
    %345 = vmatpush.msra.mxu0 %v24
    %346 = vmatmul.f32.gmra.mxu0 %v328
    %v347 = vpop.f32.mrf.mxu0
    %v348 = vadd.f32 0.0, %v347
    %349 = vdwg.mxu0
    %v350 = vadd.f32 %v325, %v348
    %v351 = vxor.u32 %v350, 2147483648
    %v352 = vmul.f32 %v351, 1.442695
    %v353 = vpow.pop %v352
    %v354 = vadd.f32 %v353, 1.0
    %v355 = vrcp.pop %v354
    %v356 = vmul.f32 %v354, %v355
    %v357 = vsub.f32 1.0, %v356
    %v358 = vmul.f32 %v355, %v357
    %v359 = vadd.f32 %v355, %v358
    %vm360 = vweird.f32 %v354
    %vm361 = vweird.f32 %v355
    %vm362 = vmor %vm360, %vm361
    %v363 = vsel %vm362, %v355, %v359
    %v364 = vand.u32 2147483647, %v354
    %vm365 = vcmp.eq.f32.partialorder %v364, 8.507059e+37
    %v366 = vand.u32 %v354, 2147483648
    %v367 = vor.u32 1.1754944e-38, %v366
    %v368 = vsel %vm365, %v367, %v363
    %v369 = vmul.f32 1.0, %v368
    %v370 = vmul.f32 %v369, 2.0
    %v371 = vsub.f32 %v370, 1.0
    %373 = vrot.lane.b32.xlu0 %v322, 32
    %v374 = vpop.permute.xlu0 %373
    %v376 = vmul.f32 %v369, %v374
    %378 = vrot.lane.b32.xlu0 %v371, 32
    %v379 = vpop.permute.xlu0 %378
    %v381 = vmul.f32 %v369, %v379
    %383 = vrot.lane.b32.xlu0 %v381, 32
    %v384 = vpop.permute.xlu0 %383
    %v386 = vadd.f32 %v376, %v384
    %v387 = vtanh.pop %v386
    %389 = vrot.lane.b32.xlu0 %v387, 32
    %v390 = vpop.permute.xlu0 %389
    %v392 = vmul.f32 %v369, %v390
    %vm393 = vcmp.eq.s32.totalorder %v312, 0
    %v395 = vrot.slane %v392, 1
    %v396 = vperm.slane %v392, 0
    %v397 = vperm.slane %v395, 0
    %v400 = vsel %vm393, 1, 0
    %vm401 = vcmp.eq.s32.totalorder %v400, 1
    %v402 = vsel %vm401, %v396, 0.0
    %v403 = vsel %vm401, %v397, 0.0
    %s404 = sadd.s32 %s323, 2
    %s405 = scalar_lea.vmem [#allocation4], %s404
    %v406 = vld [vmem:[%s405] sm:$0x3]
    %407 = vrot.lane.b32.xlu0 %v392, 64
    %v408 = vpop.permute.xlu0 %407
    %v409 = vsel %vm326, %v408, 0
    %411 = vmatpush.msra.mxu0 0.0
    %412 = vmatpush.msra.mxu0 0.0
    %413 = vmatpush.msra.mxu0 0.0
    %414 = vmatpush.msra.mxu0 0.0
    %415 = vmatpush.msra.mxu0 0.0
    %416 = vmatpush.msra.mxu0 0.0
    %417 = vmatpush.msra.mxu0 0.0
    %418 = vmatpush.msra.mxu0 0.0
    %419 = vmatpush.msra.mxu0 0.0
    %420 = vmatpush.msra.mxu0 0.0
    %421 = vmatpush.msra.mxu0 0.0
    %422 = vmatpush.msra.mxu0 0.0
    %423 = vmatpush.msra.mxu0 %v27
    %424 = vmatpush.msra.mxu0 %v26
    %425 = vmatpush.msra.mxu0 %v25
    %426 = vmatpush.msra.mxu0 %v24
    %427 = vmatmul.f32.gmra.mxu0 %v409
    %v428 = vpop.f32.mrf.mxu0
    %v429 = vadd.f32 0.0, %v428
    %430 = vdwg.mxu0
    %v431 = vadd.f32 %v406, %v429
    %v432 = vxor.u32 %v431, 2147483648
    %v433 = vmul.f32 %v432, 1.442695
    %v434 = vpow.pop %v433
    %v435 = vadd.f32 %v434, 1.0
    %v436 = vrcp.pop %v435
    %v437 = vmul.f32 %v435, %v436
    %v438 = vsub.f32 1.0, %v437
    %v439 = vmul.f32 %v436, %v438
    %v440 = vadd.f32 %v436, %v439
    %vm441 = vweird.f32 %v435
    %vm442 = vweird.f32 %v436
    %vm443 = vmor %vm441, %vm442
    %v444 = vsel %vm443, %v436, %v440
    %v445 = vand.u32 2147483647, %v435
    %vm446 = vcmp.eq.f32.partialorder %v445, 8.507059e+37
    %v447 = vand.u32 %v435, 2147483648
    %v448 = vor.u32 1.1754944e-38, %v447
    %v449 = vsel %vm446, %v448, %v444
    %v450 = vmul.f32 1.0, %v449
    %v451 = vmul.f32 %v450, 2.0
    %v452 = vsub.f32 %v451, 1.0
    %v453 = vmul.f32 %v450, %v386
    %455 = vrot.lane.b32.xlu0 %v452, 32
    %v456 = vpop.permute.xlu0 %455
    %v458 = vmul.f32 %v450, %v456
    %460 = vrot.lane.b32.xlu0 %v458, 32
    %v461 = vpop.permute.xlu0 %460
    %v463 = vadd.f32 %v453, %v461
    %v464 = vtanh.pop %v463
    %466 = vrot.lane.b32.xlu0 %v464, 32
    %v467 = vpop.permute.xlu0 %466
    %v469 = vmul.f32 %v450, %v467
    %vm470 = vcmp.eq.s32.totalorder %v312, 1
    %v472 = vrot.slane %v469, 1
    %v473 = vperm.slane %v469, 0
    %v474 = vperm.slane %v472, 0
    %v477 = vsel %vm470, 1, 0
    %vm478 = vcmp.eq.s32.totalorder %v477, 1
    %v479 = vsel %vm478, %v473, %v402
    %v480 = vsel %vm478, %v474, %v403
    %s481 = sadd.s32 %s323, 4
    %s482 = scalar_lea.vmem [#allocation4], %s481
    %v483 = vld [vmem:[%s482] sm:$0x3]
    %484 = vrot.lane.b32.xlu0 %v469, 64
    %v485 = vpop.permute.xlu0 %484
    %v486 = vsel %vm326, %v485, 0
    %488 = vmatpush.msra.mxu0 0.0
    %489 = vmatpush.msra.mxu0 0.0
    %490 = vmatpush.msra.mxu0 0.0
    %491 = vmatpush.msra.mxu0 0.0
    %492 = vmatpush.msra.mxu0 0.0
    %493 = vmatpush.msra.mxu0 0.0
    %494 = vmatpush.msra.mxu0 0.0
    %495 = vmatpush.msra.mxu0 0.0
    %496 = vmatpush.msra.mxu0 0.0
    %497 = vmatpush.msra.mxu0 0.0
    %498 = vmatpush.msra.mxu0 0.0
    %499 = vmatpush.msra.mxu0 0.0
    %500 = vmatpush.msra.mxu0 %v27
    %501 = vmatpush.msra.mxu0 %v26
    %502 = vmatpush.msra.mxu0 %v25
    %503 = vmatpush.msra.mxu0 %v24
    %504 = vmatmul.f32.gmra.mxu0 %v486
    %v505 = vpop.f32.mrf.mxu0
    %v506 = vadd.f32 0.0, %v505
    %507 = vdwg.mxu0
    %v508 = vadd.f32 %v483, %v506
    %v509 = vxor.u32 %v508, 2147483648
    %v510 = vmul.f32 %v509, 1.442695
    %v511 = vpow.pop %v510
    %v512 = vadd.f32 %v511, 1.0
    %v513 = vrcp.pop %v512
    %v514 = vmul.f32 %v512, %v513
    %v515 = vsub.f32 1.0, %v514
    %v516 = vmul.f32 %v513, %v515
    %v517 = vadd.f32 %v513, %v516
    %vm518 = vweird.f32 %v512
    %vm519 = vweird.f32 %v513
    %vm520 = vmor %vm518, %vm519
    %v521 = vsel %vm520, %v513, %v517
    %v522 = vand.u32 2147483647, %v512
    %vm523 = vcmp.eq.f32.partialorder %v522, 8.507059e+37
    %v524 = vand.u32 %v512, 2147483648
    %v525 = vor.u32 1.1754944e-38, %v524
    %v526 = vsel %vm523, %v525, %v521
    %v527 = vmul.f32 1.0, %v526
    %v528 = vmul.f32 %v527, 2.0
    %v529 = vsub.f32 %v528, 1.0
    %v530 = vmul.f32 %v527, %v463
    %532 = vrot.lane.b32.xlu0 %v529, 32
    %v533 = vpop.permute.xlu0 %532
    %v535 = vmul.f32 %v527, %v533
    %537 = vrot.lane.b32.xlu0 %v535, 32
    %v538 = vpop.permute.xlu0 %537
    %v540 = vadd.f32 %v530, %v538
    %v541 = vtanh.pop %v540
    %543 = vrot.lane.b32.xlu0 %v541, 32
    %v544 = vpop.permute.xlu0 %543
    %v546 = vmul.f32 %v527, %v544
    %vm547 = vcmp.eq.s32.totalorder %v312, 2
    %v549 = vrot.slane %v546, 1
    %v550 = vperm.slane %v546, 0
    %v551 = vperm.slane %v549, 0
    %v554 = vsel %vm547, 1, 0
    %vm555 = vcmp.eq.s32.totalorder %v554, 1
    %v556 = vsel %vm555, %v550, %v479
    %v557 = vsel %vm555, %v551, %v480
    %s558 = sadd.s32 %s323, 6
    %s559 = scalar_lea.vmem [#allocation4], %s558
    %v560 = vld [vmem:[%s559] sm:$0x3]
    %561 = vrot.lane.b32.xlu0 %v546, 64
    %v562 = vpop.permute.xlu0 %561
    %v563 = vsel %vm326, %v562, 0
    %565 = vmatpush.msra.mxu0 0.0
    %566 = vmatpush.msra.mxu0 0.0
    %567 = vmatpush.msra.mxu0 0.0
    %568 = vmatpush.msra.mxu0 0.0
    %569 = vmatpush.msra.mxu0 0.0
    %570 = vmatpush.msra.mxu0 0.0
    %571 = vmatpush.msra.mxu0 0.0
    %572 = vmatpush.msra.mxu0 0.0
    %573 = vmatpush.msra.mxu0 0.0
    %574 = vmatpush.msra.mxu0 0.0
    %575 = vmatpush.msra.mxu0 0.0
    %576 = vmatpush.msra.mxu0 0.0
    %577 = vmatpush.msra.mxu0 %v27
    %578 = vmatpush.msra.mxu0 %v26
    %579 = vmatpush.msra.mxu0 %v25
    %580 = vmatpush.msra.mxu0 %v24
    %581 = vmatmul.f32.gmra.mxu0 %v563
    %v582 = vpop.f32.mrf.mxu0
    %v583 = vadd.f32 0.0, %v582
    %584 = vdwg.mxu0
    %v585 = vadd.f32 %v560, %v583
    %v586 = vxor.u32 %v585, 2147483648
    %v587 = vmul.f32 %v586, 1.442695
    %v588 = vpow.pop %v587
    %v589 = vadd.f32 %v588, 1.0
    %v590 = vrcp.pop %v589
    %v591 = vmul.f32 %v589, %v590
    %v592 = vsub.f32 1.0, %v591
    %v593 = vmul.f32 %v590, %v592
    %v594 = vadd.f32 %v590, %v593
    %vm595 = vweird.f32 %v589
    %vm596 = vweird.f32 %v590
    %vm597 = vmor %vm595, %vm596
    %v598 = vsel %vm597, %v590, %v594
    %v599 = vand.u32 2147483647, %v589
    %vm600 = vcmp.eq.f32.partialorder %v599, 8.507059e+37
    %v601 = vand.u32 %v589, 2147483648
    %v602 = vor.u32 1.1754944e-38, %v601
    %v603 = vsel %vm600, %v602, %v598
    %v604 = vmul.f32 1.0, %v603
    %v605 = vmul.f32 %v604, 2.0
    %v606 = vsub.f32 %v605, 1.0
    %v607 = vmul.f32 %v604, %v540
    %609 = vrot.lane.b32.xlu0 %v606, 32
    %v610 = vpop.permute.xlu0 %609
    %v612 = vmul.f32 %v604, %v610
    %614 = vrot.lane.b32.xlu0 %v612, 32
    %v615 = vpop.permute.xlu0 %614
    %v617 = vadd.f32 %v607, %v615
    %v618 = vtanh.pop %v617
    %620 = vrot.lane.b32.xlu0 %v618, 32
    %v621 = vpop.permute.xlu0 %620
    %v623 = vmul.f32 %v604, %v621
    %vm624 = vcmp.eq.s32.totalorder %v312, 3
    %v626 = vrot.slane %v623, 1
    %v627 = vperm.slane %v623, 0
    %v628 = vperm.slane %v626, 0
    %v631 = vsel %vm624, 1, 0
    %vm632 = vcmp.eq.s32.totalorder %v631, 1
    %v633 = vsel %vm632, %v627, %v556
    %v634 = vsel %vm632, %v628, %v557
    %s635 = sadd.s32 %s323, 8
    %s636 = scalar_lea.vmem [#allocation4], %s635
    %v637 = vld [vmem:[%s636] sm:$0x3]
    %638 = vrot.lane.b32.xlu0 %v623, 64
    %v639 = vpop.permute.xlu0 %638
    %v640 = vsel %vm326, %v639, 0
    %642 = vmatpush.msra.mxu0 0.0
    %643 = vmatpush.msra.mxu0 0.0
    %644 = vmatpush.msra.mxu0 0.0
    %645 = vmatpush.msra.mxu0 0.0
    %646 = vmatpush.msra.mxu0 0.0
    %647 = vmatpush.msra.mxu0 0.0
    %648 = vmatpush.msra.mxu0 0.0
    %649 = vmatpush.msra.mxu0 0.0
    %650 = vmatpush.msra.mxu0 0.0
    %651 = vmatpush.msra.mxu0 0.0
    %652 = vmatpush.msra.mxu0 0.0
    %653 = vmatpush.msra.mxu0 0.0
    %654 = vmatpush.msra.mxu0 %v27
    %655 = vmatpush.msra.mxu0 %v26
    %656 = vmatpush.msra.mxu0 %v25
    %657 = vmatpush.msra.mxu0 %v24
    %658 = vmatmul.f32.gmra.mxu0 %v640
    %v659 = vpop.f32.mrf.mxu0
    %v660 = vadd.f32 0.0, %v659
    %661 = vdwg.mxu0
    %v662 = vadd.f32 %v637, %v660
    %v663 = vxor.u32 %v662, 2147483648
    %v664 = vmul.f32 %v663, 1.442695
    %v665 = vpow.pop %v664
    %v666 = vadd.f32 %v665, 1.0
    %v667 = vrcp.pop %v666
    %v668 = vmul.f32 %v666, %v667
    %v669 = vsub.f32 1.0, %v668
    %v670 = vmul.f32 %v667, %v669
    %v671 = vadd.f32 %v667, %v670
    %vm672 = vweird.f32 %v666
    %vm673 = vweird.f32 %v667
    %vm674 = vmor %vm672, %vm673
    %v675 = vsel %vm674, %v667, %v671
    %v676 = vand.u32 2147483647, %v666
    %vm677 = vcmp.eq.f32.partialorder %v676, 8.507059e+37
    %v678 = vand.u32 %v666, 2147483648
    %v679 = vor.u32 1.1754944e-38, %v678
    %v680 = vsel %vm677, %v679, %v675
    %v681 = vmul.f32 1.0, %v680
    %v682 = vmul.f32 %v681, 2.0
    %v683 = vsub.f32 %v682, 1.0
    %v684 = vmul.f32 %v681, %v617
    %686 = vrot.lane.b32.xlu0 %v683, 32
    %v687 = vpop.permute.xlu0 %686
    %v689 = vmul.f32 %v681, %v687
    %691 = vrot.lane.b32.xlu0 %v689, 32
    %v692 = vpop.permute.xlu0 %691
    %v694 = vadd.f32 %v684, %v692
    %v695 = vtanh.pop %v694
    %697 = vrot.lane.b32.xlu0 %v695, 32
    %v698 = vpop.permute.xlu0 %697
    %v700 = vmul.f32 %v681, %v698
    %vm701 = vcmp.eq.s32.totalorder %v312, 4
    %v703 = vrot.slane %v700, 1
    %v704 = vperm.slane %v700, 0
    %v705 = vperm.slane %v703, 0
    %v708 = vsel %vm701, 1, 0
    %vm709 = vcmp.eq.s32.totalorder %v708, 1
    %v710 = vsel %vm709, %v704, %v633
    %v711 = vsel %vm709, %v705, %v634
    %s712 = sadd.s32 %s323, 10
    %s713 = scalar_lea.vmem [#allocation4], %s712
    %v714 = vld [vmem:[%s713] sm:$0x3]
    %715 = vrot.lane.b32.xlu0 %v700, 64
    %v716 = vpop.permute.xlu0 %715
    %v717 = vsel %vm326, %v716, 0
    %719 = vmatpush.msra.mxu0 0.0
    %720 = vmatpush.msra.mxu0 0.0
    %721 = vmatpush.msra.mxu0 0.0
    %722 = vmatpush.msra.mxu0 0.0
    %723 = vmatpush.msra.mxu0 0.0
    %724 = vmatpush.msra.mxu0 0.0
    %725 = vmatpush.msra.mxu0 0.0
    %726 = vmatpush.msra.mxu0 0.0
    %727 = vmatpush.msra.mxu0 0.0
    %728 = vmatpush.msra.mxu0 0.0
    %729 = vmatpush.msra.mxu0 0.0
    %730 = vmatpush.msra.mxu0 0.0
    %731 = vmatpush.msra.mxu0 %v27
    %732 = vmatpush.msra.mxu0 %v26
    %733 = vmatpush.msra.mxu0 %v25
    %734 = vmatpush.msra.mxu0 %v24
    %735 = vmatmul.f32.gmra.mxu0 %v717
    %v736 = vpop.f32.mrf.mxu0
    %v737 = vadd.f32 0.0, %v736
    %738 = vdwg.mxu0
    %v739 = vadd.f32 %v714, %v737
    %v740 = vxor.u32 %v739, 2147483648
    %v741 = vmul.f32 %v740, 1.442695
    %v742 = vpow.pop %v741
    %v743 = vadd.f32 %v742, 1.0
    %v744 = vrcp.pop %v743
    %v745 = vmul.f32 %v743, %v744
    %v746 = vsub.f32 1.0, %v745
    %v747 = vmul.f32 %v744, %v746
    %v748 = vadd.f32 %v744, %v747
    %vm749 = vweird.f32 %v743
    %vm750 = vweird.f32 %v744
    %vm751 = vmor %vm749, %vm750
    %v752 = vsel %vm751, %v744, %v748
    %v753 = vand.u32 2147483647, %v743
    %vm754 = vcmp.eq.f32.partialorder %v753, 8.507059e+37
    %v755 = vand.u32 %v743, 2147483648
    %v756 = vor.u32 1.1754944e-38, %v755
    %v757 = vsel %vm754, %v756, %v752
    %v758 = vmul.f32 1.0, %v757
    %v759 = vmul.f32 %v758, 2.0
    %v760 = vsub.f32 %v759, 1.0
    %v761 = vmul.f32 %v758, %v694
    %763 = vrot.lane.b32.xlu0 %v760, 32
    %v764 = vpop.permute.xlu0 %763
    %v766 = vmul.f32 %v758, %v764
    %768 = vrot.lane.b32.xlu0 %v766, 32
    %v769 = vpop.permute.xlu0 %768
    %v771 = vadd.f32 %v761, %v769
    %v772 = vtanh.pop %v771
    %774 = vrot.lane.b32.xlu0 %v772, 32
    %v775 = vpop.permute.xlu0 %774
    %v777 = vmul.f32 %v758, %v775
    %vm778 = vcmp.eq.s32.totalorder %v312, 5
    %v780 = vrot.slane %v777, 1
    %v781 = vperm.slane %v777, 0
    %v782 = vperm.slane %v780, 0
    %v785 = vsel %vm778, 1, 0
    %vm786 = vcmp.eq.s32.totalorder %v785, 1
    %v787 = vsel %vm786, %v781, %v710
    %v788 = vsel %vm786, %v782, %v711
    %s789 = sadd.s32 %s323, 12
    %s790 = scalar_lea.vmem [#allocation4], %s789
    %v791 = vld [vmem:[%s790] sm:$0x3]
    %792 = vrot.lane.b32.xlu0 %v777, 64
    %v793 = vpop.permute.xlu0 %792
    %v794 = vsel %vm326, %v793, 0
    %796 = vmatpush.msra.mxu0 0.0
    %797 = vmatpush.msra.mxu0 0.0
    %798 = vmatpush.msra.mxu0 0.0
    %799 = vmatpush.msra.mxu0 0.0
    %800 = vmatpush.msra.mxu0 0.0
    %801 = vmatpush.msra.mxu0 0.0
    %802 = vmatpush.msra.mxu0 0.0
    %803 = vmatpush.msra.mxu0 0.0
    %804 = vmatpush.msra.mxu0 0.0
    %805 = vmatpush.msra.mxu0 0.0
    %806 = vmatpush.msra.mxu0 0.0
    %807 = vmatpush.msra.mxu0 0.0
    %808 = vmatpush.msra.mxu0 %v27
    %809 = vmatpush.msra.mxu0 %v26
    %810 = vmatpush.msra.mxu0 %v25
    %811 = vmatpush.msra.mxu0 %v24
    %812 = vmatmul.f32.gmra.mxu0 %v794
    %v813 = vpop.f32.mrf.mxu0
    %v814 = vadd.f32 0.0, %v813
    %815 = vdwg.mxu0
    %v816 = vadd.f32 %v791, %v814
    %v817 = vxor.u32 %v816, 2147483648
    %v818 = vmul.f32 %v817, 1.442695
    %v819 = vpow.pop %v818
    %v820 = vadd.f32 %v819, 1.0
    %v821 = vrcp.pop %v820
    %v822 = vmul.f32 %v820, %v821
    %v823 = vsub.f32 1.0, %v822
    %v824 = vmul.f32 %v821, %v823
    %v825 = vadd.f32 %v821, %v824
    %vm826 = vweird.f32 %v820
    %vm827 = vweird.f32 %v821
    %vm828 = vmor %vm826, %vm827
    %v829 = vsel %vm828, %v821, %v825
    %v830 = vand.u32 2147483647, %v820
    %vm831 = vcmp.eq.f32.partialorder %v830, 8.507059e+37
    %v832 = vand.u32 %v820, 2147483648
    %v833 = vor.u32 1.1754944e-38, %v832
    %v834 = vsel %vm831, %v833, %v829
    %v835 = vmul.f32 1.0, %v834
    %v836 = vmul.f32 %v835, 2.0
    %v837 = vsub.f32 %v836, 1.0
    %v838 = vmul.f32 %v835, %v771
    %840 = vrot.lane.b32.xlu0 %v837, 32
    %v841 = vpop.permute.xlu0 %840
    %v843 = vmul.f32 %v835, %v841
    %845 = vrot.lane.b32.xlu0 %v843, 32
    %v846 = vpop.permute.xlu0 %845
    %v848 = vadd.f32 %v838, %v846
    %v849 = vtanh.pop %v848
    %851 = vrot.lane.b32.xlu0 %v849, 32
    %v852 = vpop.permute.xlu0 %851
    %v854 = vmul.f32 %v835, %v852
    %vm855 = vcmp.eq.s32.totalorder %v312, 6
    %v857 = vrot.slane %v854, 1
    %v858 = vperm.slane %v854, 0
    %v859 = vperm.slane %v857, 0
    %v862 = vsel %vm855, 1, 0
    %vm863 = vcmp.eq.s32.totalorder %v862, 1
    %v864 = vsel %vm863, %v858, %v787
    %v865 = vsel %vm863, %v859, %v788
    %s866 = sadd.s32 %s323, 14
    %s867 = scalar_lea.vmem [#allocation4], %s866
    %v868 = vld [vmem:[%s867] sm:$0x3]
    %869 = vrot.lane.b32.xlu0 %v854, 64
    %v870 = vpop.permute.xlu0 %869
    %v871 = vsel %vm326, %v870, 0
    %873 = vmatpush.msra.mxu0 0.0
    %874 = vmatpush.msra.mxu0 0.0
    %875 = vmatpush.msra.mxu0 0.0
    %876 = vmatpush.msra.mxu0 0.0
    %877 = vmatpush.msra.mxu0 0.0
    %878 = vmatpush.msra.mxu0 0.0
    %879 = vmatpush.msra.mxu0 0.0
    %880 = vmatpush.msra.mxu0 0.0
    %881 = vmatpush.msra.mxu0 0.0
    %882 = vmatpush.msra.mxu0 0.0
    %883 = vmatpush.msra.mxu0 0.0
    %884 = vmatpush.msra.mxu0 0.0
    %885 = vmatpush.msra.mxu0 %v27
    %886 = vmatpush.msra.mxu0 %v26
    %887 = vmatpush.msra.mxu0 %v25
    %888 = vmatpush.msra.mxu0 %v24
    %889 = vmatmul.f32.gmra.mxu0 %v871
    %v890 = vpop.f32.mrf.mxu0
    %v891 = vadd.f32 0.0, %v890
    %892 = vdwg.mxu0
    %v893 = vadd.f32 %v868, %v891
    %v894 = vxor.u32 %v893, 2147483648
    %v895 = vmul.f32 %v894, 1.442695
    %v896 = vpow.pop %v895
    %v897 = vadd.f32 %v896, 1.0
    %v898 = vrcp.pop %v897
    %v899 = vmul.f32 %v897, %v898
    %v900 = vsub.f32 1.0, %v899
    %v901 = vmul.f32 %v898, %v900
    %v902 = vadd.f32 %v898, %v901
    %vm903 = vweird.f32 %v897
    %vm904 = vweird.f32 %v898
    %vm905 = vmor %vm903, %vm904
    %v906 = vsel %vm905, %v898, %v902
    %v907 = vand.u32 2147483647, %v897
    %vm908 = vcmp.eq.f32.partialorder %v907, 8.507059e+37
    %v909 = vand.u32 %v897, 2147483648
    %v910 = vor.u32 1.1754944e-38, %v909
    %v911 = vsel %vm908, %v910, %v906
    %v912 = vmul.f32 1.0, %v911
    %v913 = vmul.f32 %v912, 2.0
    %v914 = vsub.f32 %v913, 1.0
    %v915 = vmul.f32 %v912, %v848
    %917 = vrot.lane.b32.xlu0 %v914, 32
    %v918 = vpop.permute.xlu0 %917
    %v920 = vmul.f32 %v912, %v918
    %922 = vrot.lane.b32.xlu0 %v920, 32
    %v923 = vpop.permute.xlu0 %922
    %v925 = vadd.f32 %v915, %v923
    %v926 = vtanh.pop %v925
    %928 = vrot.lane.b32.xlu0 %v926, 32
    %v929 = vpop.permute.xlu0 %928
    %v931 = vmul.f32 %v912, %v929
    %vm932 = vcmp.eq.s32.totalorder %v312, 7
    %v934 = vrot.slane %v931, 1
    %v935 = vperm.slane %v931, 0
    %v936 = vperm.slane %v934, 0
    %v939 = vsel %vm932, 1, 0
    %vm940 = vcmp.eq.s32.totalorder %v939, 1
    %v941 = vsel %vm940, %v935, %v864
    %v942 = vsel %vm940, %v936, %v865
    %s943 = smul.u32 %s316, 8
    %946 = vrot.lane.b32.xlu0 %v941, 64
    %v947 = vpop.permute.xlu0 %946
    %948 = vrot.lane.b32.xlu0 %v942, 64
    %v949 = vpop.permute.xlu0 %948
    %s952 = scalar_lea.vmem [#allocation5], %s943
    %953 = vst.msk [vmem:[%s952] sm:$0xff] %vm326, %v947
    %954 = vst.msk [vmem:[%s952 + $0x80] sm:$0xff] %vm326, %v949
    %955 = vrot.lane.b32.xlu0 %v931, 64
    %v956 = vpop.permute.xlu0 %955
    %959 = vrot.lane.b32.xlu0 %v925, 96
    %v960 = vpop.permute.xlu0 %959
  $region26: #{conv_lstm_forward.1} parent=0 // loop_footer
    %s320 = sadd.s32 1, %s316
  $region27: #{conv_lstm_forward.1} parent=0 // loop_footer_branch
    %315 = sbr.rel target = $region23
  $region28: #{conv_lstm_forward.1} parent=0 // loop_exit
    _
  %vm962 = vcmask 254976
  %963 = vst.msk [vmem:[#allocation2] sm:$0x3] %vm962, %v321
  %964 = vst.msk [vmem:[#allocation3] sm:$0x3] %vm962, %v322
  %v965 = vld [vmem:[#allocation5] sm:$0xff]
  %v966 = vld [vmem:[#allocation5 + $0x8] sm:$0xff]
  %v967 = vld [vmem:[#allocation5 + $0x10] sm:$0xff]
  %v968 = vld [vmem:[#allocation5 + $0x18] sm:$0xff]
  %v969 = vld [vmem:[#allocation5 + $0x20] sm:$0xff]
  %v970 = vld [vmem:[#allocation5 + $0x28] sm:$0xff]
  %v971 = vld [vmem:[#allocation5 + $0x30] sm:$0xff]
  %v972 = vld [vmem:[#allocation5 + $0x38] sm:$0xff]
  %v973 = vld [vmem:[#allocation5 + $0x40] sm:$0xff]
  %v974 = vld [vmem:[#allocation5 + $0x48] sm:$0xff]
  %v975 = vld [vmem:[#allocation5 + $0x50] sm:$0xff]
  %v976 = vld [vmem:[#allocation5 + $0x58] sm:$0xff]
  %v977 = vld [vmem:[#allocation5 + $0x60] sm:$0xff]
  %v978 = vld [vmem:[#allocation5 + $0x68] sm:$0xff]
  %v979 = vld [vmem:[#allocation5 + $0x70] sm:$0xff]
  %v980 = vld [vmem:[#allocation5 + $0x78] sm:$0xff]
  %v981 = vld [vmem:[#allocation5 + $0x80] sm:$0xff]
  %v982 = vld [vmem:[#allocation5 + $0x88] sm:$0xff]
  %v983 = vld [vmem:[#allocation5 + $0x90] sm:$0xff]
  %v984 = vld [vmem:[#allocation5 + $0x98] sm:$0xff]
  %v985 = vld [vmem:[#allocation5 + $0xa0] sm:$0xff]
  %v986 = vld [vmem:[#allocation5 + $0xa8] sm:$0xff]
  %v987 = vld [vmem:[#allocation5 + $0xb0] sm:$0xff]
  %v988 = vld [vmem:[#allocation5 + $0xb8] sm:$0xff]
  %v989 = vld [vmem:[#allocation5 + $0xc0] sm:$0xff]
  %v990 = vld [vmem:[#allocation5 + $0xc8] sm:$0xff]
  %v991 = vld [vmem:[#allocation5 + $0xd0] sm:$0xff]
  %v992 = vld [vmem:[#allocation5 + $0xd8] sm:$0xff]
  %v993 = vld [vmem:[#allocation5 + $0xe0] sm:$0xff]
  %v994 = vld [vmem:[#allocation5 + $0xe8] sm:$0xff]
  %v995 = vld [vmem:[#allocation5 + $0xf0] sm:$0xff]
  %v996 = vld [vmem:[#allocation5 + $0xf8] sm:$0xff]
  %997 = vxpose.xlu0.b32.start [1/16] %v965, 128
  %998 = vxpose.xlu0.b32.cont [2/16] %v966, 128
  %999 = vxpose.xlu0.b32.cont [3/16] %v967, 128
  %1000 = vxpose.xlu0.b32.cont [4/16] %v968, 128
  %1001 = vxpose.xlu0.b32.cont [5/16] %v969, 128
  %1002 = vxpose.xlu0.b32.cont [6/16] %v970, 128
  %1003 = vxpose.xlu0.b32.cont [7/16] %v971, 128
  %1004 = vxpose.xlu0.b32.cont [8/16] %v972, 128
  %1005 = vxpose.xlu0.b32.cont [9/16] %v973, 128
  %1006 = vxpose.xlu0.b32.cont [10/16] %v974, 128
  %1007 = vxpose.xlu0.b32.cont [11/16] %v975, 128
  %1008 = vxpose.xlu0.b32.cont [12/16] %v976, 128
  %1009 = vxpose.xlu0.b32.cont [13/16] %v977, 128
  %1010 = vxpose.xlu0.b32.cont [14/16] %v978, 128
  %1011 = vxpose.xlu0.b32.cont [15/16] %v979, 128
  %1012 = vxpose.xlu0.b32.end [16/16] %v980, 128
  %v1013 = vpop.trf.xlu0
  %v1014 = vpop.trf.xlu0
  %v1015 = vpop.trf.xlu0
  %v1016 = vpop.trf.xlu0
  %v1017 = vpop.trf.xlu0
  %v1018 = vpop.trf.xlu0
  %v1019 = vpop.trf.xlu0
  %v1020 = vpop.trf.xlu0
  %v1021 = vpop.trf.xlu0
  %v1022 = vpop.trf.xlu0
  %v1023 = vpop.trf.xlu0
  %v1024 = vpop.trf.xlu0
  %v1025 = vpop.trf.xlu0
  %v1026 = vpop.trf.xlu0
  %v1027 = vpop.trf.xlu0
  %v1028 = vpop.trf.xlu0
  %1029 = vxpose.xlu0.b32.start [1/16] %v981, 128
  %1030 = vxpose.xlu0.b32.cont [2/16] %v982, 128
  %1031 = vxpose.xlu0.b32.cont [3/16] %v983, 128
  %1032 = vxpose.xlu0.b32.cont [4/16] %v984, 128
  %1033 = vxpose.xlu0.b32.cont [5/16] %v985, 128
  %1034 = vxpose.xlu0.b32.cont [6/16] %v986, 128
  %1035 = vxpose.xlu0.b32.cont [7/16] %v987, 128
  %1036 = vxpose.xlu0.b32.cont [8/16] %v988, 128
  %1037 = vxpose.xlu0.b32.cont [9/16] %v989, 128
  %1038 = vxpose.xlu0.b32.cont [10/16] %v990, 128
  %1039 = vxpose.xlu0.b32.cont [11/16] %v991, 128
  %1040 = vxpose.xlu0.b32.cont [12/16] %v992, 128
  %1041 = vxpose.xlu0.b32.cont [13/16] %v993, 128
  %1042 = vxpose.xlu0.b32.cont [14/16] %v994, 128
  %1043 = vxpose.xlu0.b32.cont [15/16] %v995, 128
  %1044 = vxpose.xlu0.b32.end [16/16] %v996, 128
  %v1045 = vpop.trf.xlu0
  %v1046 = vpop.trf.xlu0
  %v1047 = vpop.trf.xlu0
  %v1048 = vpop.trf.xlu0
  %v1049 = vpop.trf.xlu0
  %v1050 = vpop.trf.xlu0
  %v1051 = vpop.trf.xlu0
  %v1052 = vpop.trf.xlu0
  %v1053 = vpop.trf.xlu0
  %v1054 = vpop.trf.xlu0
  %v1055 = vpop.trf.xlu0
  %v1056 = vpop.trf.xlu0
  %v1057 = vpop.trf.xlu0
  %v1058 = vpop.trf.xlu0
  %v1059 = vpop.trf.xlu0
  %v1060 = vpop.trf.xlu0
  %1061 = vst [vmem:[%s4] sm:$0xff] %v1013
  %1062 = vst [vmem:[%s4 + $0x8] sm:$0xff] %v1014
  %1063 = vst [vmem:[%s4 + $0x10] sm:$0xff] %v1015
  %1064 = vst [vmem:[%s4 + $0x18] sm:$0xff] %v1016
  %1065 = vst [vmem:[%s4 + $0x20] sm:$0xff] %v1045
  %1066 = vst [vmem:[%s4 + $0x28] sm:$0xff] %v1046
  %1067 = vst [vmem:[%s4 + $0x30] sm:$0xff] %v1047
  %1068 = vst [vmem:[%s4 + $0x38] sm:$0xff] %v1048
  // Predicated region
  $region29: #{conv_lstm_forward.1} parent=0 // pred_check
    _
  $region30: #{conv_lstm_forward.1} parent=0 // pred_check_branch
    %1070 = sbr.rel (0) target = $region32
  $region31: #{conv_lstm_forward.1} parent=0 // pred_region
    _
  $region32: #{conv_lstm_forward.1} parent=0 // pred_fallthru
    _
  // Predicated region
  $region33: #{conv_lstm_forward.1} parent=0 // pred_check
    _
  $region34: #{conv_lstm_forward.1} parent=0 // pred_check_branch
    %1072 = sbr.rel (0) target = $region36
  $region35: #{conv_lstm_forward.1} parent=0 // pred_region
    _
  $region36: #{conv_lstm_forward.1} parent=0 // pred_fallthru
    _

</llo_original>
